<compile_context>
chip_gen: v7x
topology: tpu7x:2x2x1
jax: 0.10.0
libtpu: 0.0.40
codegen_flags: <defaults>
</compile_context>

<pallas_src>
import functools

import jax
import jax.numpy as jnp
import numpy as np
from jax.experimental import pallas as pl
from jax.experimental.pallas import tpu as pltpu

LANE = 128


def _round_up(x, m):
    return (x + m - 1) // m * m


# -----------------------------------------------------------------------------
# Fused kernel: conv1 GEMM -> space-to-depth canvas -> conv2 (implicit im2col,
# 9 taps) -> ReLU -> GAP -> Linear -> ReLU -> Linear.  One grid step per sample.
# -----------------------------------------------------------------------------
def _disc_kernel(p1_ref, w1_ref, b1_ref, w2_ref, b2_ref, wl_ref, bl_ref,
                 wl2_ref, bl2_ref, o_ref, xps_ref, *, H2, W2, C1, C2):
    HW = H2 * W2

    # ---- conv1 (Down 1): im2col GEMM for this sample.  Rows arrive already in
    #      space-to-depth order (ry, rx, i, j), so the result scatters into the
    #      conv2 canvas with contiguous stores.
    h1 = jnp.dot(p1_ref[...], w1_ref[...], preferred_element_type=jnp.float32)
    h1 = jnp.maximum(h1 + b1_ref[...], 0.0).astype(jnp.bfloat16)      # (4*HW, C1)

    # ---- scatter into the zero-padded space-to-depth canvas (implicit im2col)
    xps_ref[...] = jnp.zeros_like(xps_ref)
    for g in range(4):                                                 # g = ry*2 + rx
        xps_ref[g, 1:1 + H2, 1:1 + W2, :] = (
            h1[g * HW:(g + 1) * HW].reshape(H2, W2, C1))

    # ---- conv2 (Down 2): 9 taps, each a contiguous slab of the canvas.
    #      tap index k in {0,1,2}  ->  (parity, start row in the haloed canvas)
    TAP = ((1, 0), (0, 1), (1, 1))
    acc = jnp.zeros((HW, C2), jnp.float32)
    for ky in range(3):
        ry, si = TAP[ky]
        for kx in range(3):
            rx, sj = TAP[kx]
            slab = xps_ref[ry * 2 + rx, si:si + H2, sj:sj + W2, :]     # (H2, W2, C1)
            acc = acc + jnp.dot(slab.reshape(HW, C1), w2_ref[ky * 3 + kx],
                                preferred_element_type=jnp.float32)
    x2 = jnp.maximum(acc + b2_ref[...], 0.0)                           # (HW, C2) f32

    # ---- head: GAP -> Linear -> ReLU -> Linear (1-wide final => VPU reduce)
    gap = (jnp.sum(x2, axis=0, keepdims=True) * (1.0 / HW)).astype(jnp.bfloat16)
    h = jnp.dot(gap, wl_ref[...], preferred_element_type=jnp.float32)
    h = jnp.maximum(h + bl_ref[...], 0.0)                              # (1, Hh)
    y = jnp.sum(h * wl2_ref[...], axis=-1, keepdims=True) + bl2_ref[...]   # (1, 1)
    o_ref[...] = jnp.broadcast_to(y, o_ref.shape).astype(o_ref.dtype)


def _fused_forward(p1, w1g, b1, w2g, b2, wl, bl, wl2r, bl2, *, H2, W2):
    B, M1, K1p = p1.shape
    C1 = w1g.shape[1]
    C2 = w2g.shape[2]
    Hh = wl.shape[1]

    kern = functools.partial(_disc_kernel, H2=H2, W2=W2, C1=C1, C2=C2)
    flops = 2 * B * (M1 * K1p * C1 + 9 * H2 * W2 * C1 * C2 + C2 * Hh + Hh)
    bytes_accessed = ((p1.size + w1g.size + w2g.size + wl.size) * 2
                      + (b1.size + b2.size + bl.size + wl2r.size + bl2.size) * 4
                      + B * LANE * 4)

    out = pl.pallas_call(
        kern,
        out_shape=jax.ShapeDtypeStruct((B, 1, LANE), jnp.float32),
        grid=(B,),
        in_specs=[
            pl.BlockSpec((None, M1, K1p), lambda b: (b, 0, 0)),   # per-sample patches
            pl.BlockSpec((K1p, C1), lambda b: (0, 0)),            # conv1 weight (resident)
            pl.BlockSpec((1, C1), lambda b: (0, 0)),              # conv1 bias
            pl.BlockSpec((9, C1, C2), lambda b: (0, 0, 0)),       # conv2 weight per tap
            pl.BlockSpec((1, C2), lambda b: (0, 0)),              # conv2 bias
            pl.BlockSpec((C2, Hh), lambda b: (0, 0)),             # head Linear 1 (bf16)
            pl.BlockSpec((1, Hh), lambda b: (0, 0)),              # head bias 1
            pl.BlockSpec((1, Hh), lambda b: (0, 0)),              # head Linear 2 (row)
            pl.BlockSpec((1, 1), lambda b: (0, 0)),               # head bias 2
        ],
        out_specs=pl.BlockSpec((None, 1, LANE), lambda b: (b, 0, 0)),
        scratch_shapes=[
            # zero-padded space-to-depth canvas: (parity group, H2+1, W2+1, C1)
            pltpu.VMEM((4, H2 + 1, W2 + 1, C1), jnp.bfloat16),
        ],
        compiler_params=pltpu.CompilerParams(dimension_semantics=("parallel",)),
        cost_estimate=pl.CostEstimate(flops=flops, transcendentals=0,
                                      bytes_accessed=bytes_accessed),
    )(p1, w1g, b1, w2g, b2, wl, bl, wl2r, bl2)
    return out[:, 0, :1]                                               # (B, 1)


# -----------------------------------------------------------------------------
# JAX-side glue: conv1 im2col on the raw (tiny) input, weight padding/casting.
# -----------------------------------------------------------------------------
def _im2col(x_nhwc, kh, kw, stride, pad):
    B, H, W, C = x_nhwc.shape
    xp = jnp.pad(x_nhwc, ((0, 0), (pad, pad), (pad, pad), (0, 0)))
    Ho = (H + 2 * pad - kh) // stride + 1
    Wo = (W + 2 * pad - kw) // stride + 1
    cols = []
    for ky in range(kh):
        for kx in range(kw):
            cols.append(xp[:, ky:ky + stride * Ho:stride, kx:kx + stride * Wo:stride, :])
    return jnp.concatenate(cols, axis=-1)                              # (B, Ho, Wo, kh*kw*C)


def init_params(key, rgb=True):
    cin = 3 if rgb else 1
    f1, f2, hidden = 32, 64, 100
    ks = jax.random.split(key, 8)
    s = 0.05
    return {
        "w1": s * jax.random.normal(ks[0], (3, 3, cin, f1), jnp.float32),
        "b1": s * jax.random.normal(ks[1], (f1,), jnp.float32),
        "w2": s * jax.random.normal(ks[2], (3, 3, f1, f2), jnp.float32),
        "b2": s * jax.random.normal(ks[3], (f2,), jnp.float32),
        "wl": s * jax.random.normal(ks[4], (f2, hidden), jnp.float32),
        "bl": s * jax.random.normal(ks[5], (hidden,), jnp.float32),
        "wl2": s * jax.random.normal(ks[6], (hidden, 1), jnp.float32),
        "bl2": s * jax.random.normal(ks[7], (1,), jnp.float32),
    }


@jax.jit
def discriminative_forward(x_nchw, params):
    B, cin, H, W = x_nchw.shape
    if H % 4 != 0 or W % 4 != 0:
        raise ValueError("Image must be a factor of 4")
    f1 = params["b1"].shape[0]
    f2 = params["b2"].shape[0]
    hidden = params["bl"].shape[0]
    f1p, f2p, hp = _round_up(f1, LANE), _round_up(f2, LANE), _round_up(hidden, LANE)

    H1, W1 = H // 2, W // 2
    H2, W2 = H1 // 2, W1 // 2
    K1 = 9 * cin
    K1p = _round_up(K1, LANE)

    # conv1 im2col on the raw cin-channel input; rows pre-ordered space-to-depth
    # (b, ry, rx, i, j) so conv1's GEMM output scatters contiguously into the
    # conv2 canvas inside the kernel.
    x = jnp.transpose(x_nchw, (0, 2, 3, 1)).astype(jnp.bfloat16)       # NHWC bf16
    patches = _im2col(x, 3, 3, stride=2, pad=1)                        # (B, H1, W1, K1)
    p1 = patches.reshape(B, H2, 2, W2, 2, K1).transpose(0, 2, 4, 1, 3, 5)
    p1 = p1.reshape(B, 4 * H2 * W2, K1)
    p1 = jnp.pad(p1, ((0, 0), (0, 0), (0, K1p - K1)))                  # lane-dense K

    # Zero-pad all channel dims to 128; padded channels stay exactly zero
    # (zero bias + ReLU) and hit zero weights downstream.
    w1g = jnp.pad(params["w1"].reshape(K1, f1),
                  ((0, K1p - K1), (0, f1p - f1))).astype(jnp.bfloat16)
    b1 = jnp.pad(params["b1"], ((0, f1p - f1),)).reshape(1, f1p)
    w2g = jnp.pad(params["w2"], ((0, 0), (0, 0), (0, f1p - f1), (0, f2p - f2)))
    w2g = w2g.reshape(9, f1p, f2p).astype(jnp.bfloat16)
    b2 = jnp.pad(params["b2"], ((0, f2p - f2),)).reshape(1, f2p)
    wl = jnp.pad(params["wl"], ((0, f2p - f2), (0, hp - hidden))).astype(jnp.bfloat16)
    bl = jnp.pad(params["bl"], ((0, hp - hidden),)).reshape(1, hp)
    wl2r = jnp.pad(params["wl2"][:, 0], ((0, hp - hidden),)).reshape(1, hp)
    bl2 = params["bl2"].reshape(1, 1)

    return _fused_forward(p1, w1g, b1, w2g, b2, wl, bl, wl2r, bl2, H2=H2, W2=W2)


# -----------------------------------------------------------------------------
# Pure-JAX f32 reference (same assumed Down = Conv(3x3, s2, p1) + ReLU)
# -----------------------------------------------------------------------------
def _reference_forward(x_nchw, params):
    dn = ("NHWC", "HWIO", "NHWC")
    x = jnp.transpose(x_nchw, (0, 2, 3, 1))
    x1 = jax.lax.conv_general_dilated(x, params["w1"], (2, 2), ((1, 1), (1, 1)),
                                      dimension_numbers=dn)
    x1 = jax.nn.relu(x1 + params["b1"])
    x2 = jax.lax.conv_general_dilated(x1, params["w2"], (2, 2), ((1, 1), (1, 1)),
                                      dimension_numbers=dn)
    x2 = jax.nn.relu(x2 + params["b2"])
    gap = jnp.mean(x2, axis=(1, 2))                                    # (B, f2)
    h = jax.nn.relu(gap @ params["wl"] + params["bl"])
    return h @ params["wl2"] + params["bl2"]                           # (B, 1)


if __name__ == "__main__":
    key = jax.random.PRNGKey(0)
    k_x, k_p = jax.random.split(key)
    image_size = 16
    x = jax.random.normal(k_x, (2, 3, image_size, image_size), jnp.float32)  # NCHW
    params = init_params(k_p, rgb=True)

    y = discriminative_forward(x, params)
    y = jax.block_until_ready(y)
    assert y.shape == (2, 1), y.shape

    # Loose sanity check vs. an f32 reference (kernel runs bf16 activations).
    y_ref = jax.block_until_ready(_reference_forward(x, params))
    np.testing.assert_allclose(np.asarray(y), np.asarray(y_ref), atol=1e-2, rtol=1e-1)

    print("KERNEL_OK")
</pallas_src>

<mosaic_0001>
module attributes {stable_mosaic.version = 11 : i64} {
  func.func @_disc_kernel(%arg0: i32, %arg1: memref<1x64x128xbf16, #tpu.memory_space<vmem>>, %arg2: memref<128x128xbf16, #tpu.memory_space<vmem>>, %arg3: memref<1x128xf32, #tpu.memory_space<vmem>>, %arg4: memref<9x128x128xbf16, #tpu.memory_space<vmem>>, %arg5: memref<1x128xf32, #tpu.memory_space<vmem>>, %arg6: memref<128x128xbf16, #tpu.memory_space<vmem>>, %arg7: memref<1x128xf32, #tpu.memory_space<vmem>>, %arg8: memref<1x128xf32, #tpu.memory_space<vmem>>, %arg9: memref<1x1xf32, #tpu.memory_space<vmem>>, %arg10: memref<1x1x128xf32, #tpu.memory_space<vmem>>, %arg11: memref<4x5x5x128xbf16, #tpu.memory_space<vmem>>) attributes {dimension_semantics = [#tpu.dimension_semantics<parallel>], iteration_bounds = array<i64: 2>, scalar_prefetch = 0 : i64, scratch_operands = 1 : i64, tpu.core_type = #tpu.core_type<tc>, window_params = [{transform_indices = @transform_0, window_bounds = array<i64: 1, 64, 128>}, {pipeline_mode = #tpu.pipeline_mode<synchronous>, transform_indices = @transform_1, window_bounds = array<i64: 128, 128>}, {pipeline_mode = #tpu.pipeline_mode<synchronous>, transform_indices = @transform_2, window_bounds = array<i64: 1, 128>}, {pipeline_mode = #tpu.pipeline_mode<synchronous>, transform_indices = @transform_3, window_bounds = array<i64: 9, 128, 128>}, {pipeline_mode = #tpu.pipeline_mode<synchronous>, transform_indices = @transform_4, window_bounds = array<i64: 1, 128>}, {pipeline_mode = #tpu.pipeline_mode<synchronous>, transform_indices = @transform_5, window_bounds = array<i64: 128, 128>}, {pipeline_mode = #tpu.pipeline_mode<synchronous>, transform_indices = @transform_6, window_bounds = array<i64: 1, 128>}, {pipeline_mode = #tpu.pipeline_mode<synchronous>, transform_indices = @transform_7, window_bounds = array<i64: 1, 128>}, {pipeline_mode = #tpu.pipeline_mode<synchronous>, transform_indices = @transform_8, window_bounds = array<i64: 1, 1>}, {transform_indices = @transform_9, window_bounds = array<i64: 1, 1, 128>}]} {
    %c0 = arith.constant 0 : index
    %c0_0 = arith.constant 0 : index
    %c0_1 = arith.constant 0 : index
    %0 = vector.load %arg1[%c0, %c0_0, %c0_1] : memref<1x64x128xbf16, #tpu.memory_space<vmem>>, vector<1x64x128xbf16>
    %1 = vector.shape_cast %0 : vector<1x64x128xbf16> to vector<64x128xbf16>
    %c0_2 = arith.constant 0 : index
    %c0_3 = arith.constant 0 : index
    %2 = vector.load %arg2[%c0_2, %c0_3] : memref<128x128xbf16, #tpu.memory_space<vmem>>, vector<128x128xbf16>
    %cst = arith.constant dense<0.000000e+00> : vector<64x128xf32>
    %3 = tpu.matmul %1, %2, %cst {dimension_numbers = #tpu.dot_dimension_numbers<[1], [0], [0], [1], [0, 0, 1, 1], [], []>} : vector<64x128xbf16>, vector<128x128xbf16>, vector<64x128xf32> -> vector<64x128xf32>
    %c0_4 = arith.constant 0 : index
    %c0_5 = arith.constant 0 : index
    %4 = vector.load %arg3[%c0_4, %c0_5] : memref<1x128xf32, #tpu.memory_space<vmem>>, vector<1x128xf32>
    %5 = vector.broadcast %4 : vector<1x128xf32> to vector<64x128xf32>
    %6 = arith.addf %3, %5 : vector<64x128xf32>
    %cst_6 = arith.constant 0.000000e+00 : f32
    %7 = vector.broadcast %cst_6 : f32 to vector<64x128xf32>
    %8 = arith.maximumf %6, %7 : vector<64x128xf32>
    %9 = arith.truncf %8 : vector<64x128xf32> to vector<64x128xbf16>
    %cst_7 = arith.constant 0.000000e+00 : bf16
    %10 = vector.broadcast %cst_7 : bf16 to vector<4x5x5x128xbf16>
    %c0_8 = arith.constant 0 : index
    %c0_9 = arith.constant 0 : index
    %c0_10 = arith.constant 0 : index
    %c0_11 = arith.constant 0 : index
    %11 = vector.load %arg11[%c0_8, %c0_9, %c0_10, %c0_11] : memref<4x5x5x128xbf16, #tpu.memory_space<vmem>>, vector<4x5x5x128xbf16>
    tpu.vector_store %arg11[%c0_8, %c0_9, %c0_10, %c0_11], %10 {strides = array<i32>} : memref<4x5x5x128xbf16, #tpu.memory_space<vmem>>, vector<4x5x5x128xbf16>,
    %12 = vector.extract_strided_slice %9 {offsets = [0, 0], sizes = [16, 128], strides = [1, 1]} : vector<64x128xbf16> to vector<16x128xbf16>
    %13 = vector.shape_cast %12 : vector<16x128xbf16> to vector<4x4x128xbf16>
    %c0_12 = arith.constant 0 : index
    %c1 = arith.constant 1 : index
    %c1_13 = arith.constant 1 : index
    %c0_14 = arith.constant 0 : index
    %14 = vector.load %arg11[%c0_12, %c1, %c1_13, %c0_14] : memref<4x5x5x128xbf16, #tpu.memory_space<vmem>>, vector<1x4x4x128xbf16>
    %15 = vector.shape_cast %14 : vector<1x4x4x128xbf16> to vector<4x4x128xbf16>
    %16 = vector.shape_cast %13 : vector<4x4x128xbf16> to vector<1x4x4x128xbf16>
    tpu.vector_store %arg11[%c0_12, %c1, %c1_13, %c0_14], %16 {strides = array<i32>} : memref<4x5x5x128xbf16, #tpu.memory_space<vmem>>, vector<1x4x4x128xbf16>,
    %17 = vector.extract_strided_slice %9 {offsets = [16, 0], sizes = [16, 128], strides = [1, 1]} : vector<64x128xbf16> to vector<16x128xbf16>
    %18 = vector.shape_cast %17 : vector<16x128xbf16> to vector<4x4x128xbf16>
    %c1_15 = arith.constant 1 : index
    %c1_16 = arith.constant 1 : index
    %c1_17 = arith.constant 1 : index
    %c0_18 = arith.constant 0 : index
    %19 = vector.load %arg11[%c1_15, %c1_16, %c1_17, %c0_18] : memref<4x5x5x128xbf16, #tpu.memory_space<vmem>>, vector<1x4x4x128xbf16>
    %20 = vector.shape_cast %19 : vector<1x4x4x128xbf16> to vector<4x4x128xbf16>
    %21 = vector.shape_cast %18 : vector<4x4x128xbf16> to vector<1x4x4x128xbf16>
    tpu.vector_store %arg11[%c1_15, %c1_16, %c1_17, %c0_18], %21 {strides = array<i32>} : memref<4x5x5x128xbf16, #tpu.memory_space<vmem>>, vector<1x4x4x128xbf16>,
    %22 = vector.extract_strided_slice %9 {offsets = [32, 0], sizes = [16, 128], strides = [1, 1]} : vector<64x128xbf16> to vector<16x128xbf16>
    %23 = vector.shape_cast %22 : vector<16x128xbf16> to vector<4x4x128xbf16>
    %c2 = arith.constant 2 : index
    %c1_19 = arith.constant 1 : index
    %c1_20 = arith.constant 1 : index
    %c0_21 = arith.constant 0 : index
    %24 = vector.load %arg11[%c2, %c1_19, %c1_20, %c0_21] : memref<4x5x5x128xbf16, #tpu.memory_space<vmem>>, vector<1x4x4x128xbf16>
    %25 = vector.shape_cast %24 : vector<1x4x4x128xbf16> to vector<4x4x128xbf16>
    %26 = vector.shape_cast %23 : vector<4x4x128xbf16> to vector<1x4x4x128xbf16>
    tpu.vector_store %arg11[%c2, %c1_19, %c1_20, %c0_21], %26 {strides = array<i32>} : memref<4x5x5x128xbf16, #tpu.memory_space<vmem>>, vector<1x4x4x128xbf16>,
    %27 = vector.extract_strided_slice %9 {offsets = [48, 0], sizes = [16, 128], strides = [1, 1]} : vector<64x128xbf16> to vector<16x128xbf16>
    %28 = vector.shape_cast %27 : vector<16x128xbf16> to vector<4x4x128xbf16>
    %c3 = arith.constant 3 : index
    %c1_22 = arith.constant 1 : index
    %c1_23 = arith.constant 1 : index
    %c0_24 = arith.constant 0 : index
    %29 = vector.load %arg11[%c3, %c1_22, %c1_23, %c0_24] : memref<4x5x5x128xbf16, #tpu.memory_space<vmem>>, vector<1x4x4x128xbf16>
    %30 = vector.shape_cast %29 : vector<1x4x4x128xbf16> to vector<4x4x128xbf16>
    %31 = vector.shape_cast %28 : vector<4x4x128xbf16> to vector<1x4x4x128xbf16>
    tpu.vector_store %arg11[%c3, %c1_22, %c1_23, %c0_24], %31 {strides = array<i32>} : memref<4x5x5x128xbf16, #tpu.memory_space<vmem>>, vector<1x4x4x128xbf16>,
    %cst_25 = arith.constant 0.000000e+00 : f32
    %32 = vector.broadcast %cst_25 : f32 to vector<16x128xf32>
    %c3_26 = arith.constant 3 : index
    %c0_27 = arith.constant 0 : index
    %c0_28 = arith.constant 0 : index
    %c0_29 = arith.constant 0 : index
    %33 = vector.load %arg11[%c3_26, %c0_27, %c0_28, %c0_29] : memref<4x5x5x128xbf16, #tpu.memory_space<vmem>>, vector<1x4x4x128xbf16>
    %34 = vector.shape_cast %33 : vector<1x4x4x128xbf16> to vector<4x4x128xbf16>
    %35 = vector.shape_cast %34 : vector<4x4x128xbf16> to vector<16x128xbf16>
    %c0_30 = arith.constant 0 : index
    %c0_31 = arith.constant 0 : index
    %c0_32 = arith.constant 0 : index
    %36 = vector.load %arg4[%c0_30, %c0_31, %c0_32] : memref<9x128x128xbf16, #tpu.memory_space<vmem>>, vector<1x128x128xbf16>
    %37 = vector.shape_cast %36 : vector<1x128x128xbf16> to vector<128x128xbf16>
    %cst_33 = arith.constant dense<0.000000e+00> : vector<16x128xf32>
    %38 = tpu.matmul %35, %37, %cst_33 {dimension_numbers = #tpu.dot_dimension_numbers<[1], [0], [0], [1], [0, 0, 1, 1], [], []>} : vector<16x128xbf16>, vector<128x128xbf16>, vector<16x128xf32> -> vector<16x128xf32>
    %39 = arith.addf %32, %38 : vector<16x128xf32>
    %c2_34 = arith.constant 2 : index
    %c0_35 = arith.constant 0 : index
    %c1_36 = arith.constant 1 : index
    %c0_37 = arith.constant 0 : index
    %40 = vector.load %arg11[%c2_34, %c0_35, %c1_36, %c0_37] : memref<4x5x5x128xbf16, #tpu.memory_space<vmem>>, vector<1x4x4x128xbf16>
    %41 = vector.shape_cast %40 : vector<1x4x4x128xbf16> to vector<4x4x128xbf16>
    %42 = vector.shape_cast %41 : vector<4x4x128xbf16> to vector<16x128xbf16>
    %c1_38 = arith.constant 1 : index
    %c0_39 = arith.constant 0 : index
    %c0_40 = arith.constant 0 : index
    %43 = vector.load %arg4[%c1_38, %c0_39, %c0_40] : memref<9x128x128xbf16, #tpu.memory_space<vmem>>, vector<1x128x128xbf16>
    %44 = vector.shape_cast %43 : vector<1x128x128xbf16> to vector<128x128xbf16>
    %cst_41 = arith.constant dense<0.000000e+00> : vector<16x128xf32>
    %45 = tpu.matmul %42, %44, %cst_41 {dimension_numbers = #tpu.dot_dimension_numbers<[1], [0], [0], [1], [0, 0, 1, 1], [], []>} : vector<16x128xbf16>, vector<128x128xbf16>, vector<16x128xf32> -> vector<16x128xf32>
    %46 = arith.addf %39, %45 : vector<16x128xf32>
    %c3_42 = arith.constant 3 : index
    %c0_43 = arith.constant 0 : index
    %c1_44 = arith.constant 1 : index
    %c0_45 = arith.constant 0 : index
    %47 = vector.load %arg11[%c3_42, %c0_43, %c1_44, %c0_45] : memref<4x5x5x128xbf16, #tpu.memory_space<vmem>>, vector<1x4x4x128xbf16>
    %48 = vector.shape_cast %47 : vector<1x4x4x128xbf16> to vector<4x4x128xbf16>
    %49 = vector.shape_cast %48 : vector<4x4x128xbf16> to vector<16x128xbf16>
    %c2_46 = arith.constant 2 : index
    %c0_47 = arith.constant 0 : index
    %c0_48 = arith.constant 0 : index
    %50 = vector.load %arg4[%c2_46, %c0_47, %c0_48] : memref<9x128x128xbf16, #tpu.memory_space<vmem>>, vector<1x128x128xbf16>
    %51 = vector.shape_cast %50 : vector<1x128x128xbf16> to vector<128x128xbf16>
    %cst_49 = arith.constant dense<0.000000e+00> : vector<16x128xf32>
    %52 = tpu.matmul %49, %51, %cst_49 {dimension_numbers = #tpu.dot_dimension_numbers<[1], [0], [0], [1], [0, 0, 1, 1], [], []>} : vector<16x128xbf16>, vector<128x128xbf16>, vector<16x128xf32> -> vector<16x128xf32>
    %53 = arith.addf %46, %52 : vector<16x128xf32>
    %c1_50 = arith.constant 1 : index
    %c1_51 = arith.constant 1 : index
    %c0_52 = arith.constant 0 : index
    %c0_53 = arith.constant 0 : index
    %54 = vector.load %arg11[%c1_50, %c1_51, %c0_52, %c0_53] : memref<4x5x5x128xbf16, #tpu.memory_space<vmem>>, vector<1x4x4x128xbf16>
    %55 = vector.shape_cast %54 : vector<1x4x4x128xbf16> to vector<4x4x128xbf16>
    %56 = vector.shape_cast %55 : vector<4x4x128xbf16> to vector<16x128xbf16>
    %c3_54 = arith.constant 3 : index
    %c0_55 = arith.constant 0 : index
    %c0_56 = arith.constant 0 : index
    %57 = vector.load %arg4[%c3_54, %c0_55, %c0_56] : memref<9x128x128xbf16, #tpu.memory_space<vmem>>, vector<1x128x128xbf16>
    %58 = vector.shape_cast %57 : vector<1x128x128xbf16> to vector<128x128xbf16>
    %cst_57 = arith.constant dense<0.000000e+00> : vector<16x128xf32>
    %59 = tpu.matmul %56, %58, %cst_57 {dimension_numbers = #tpu.dot_dimension_numbers<[1], [0], [0], [1], [0, 0, 1, 1], [], []>} : vector<16x128xbf16>, vector<128x128xbf16>, vector<16x128xf32> -> vector<16x128xf32>
    %60 = arith.addf %53, %59 : vector<16x128xf32>
    %c0_58 = arith.constant 0 : index
    %c1_59 = arith.constant 1 : index
    %c1_60 = arith.constant 1 : index
    %c0_61 = arith.constant 0 : index
    %61 = vector.load %arg11[%c0_58, %c1_59, %c1_60, %c0_61] : memref<4x5x5x128xbf16, #tpu.memory_space<vmem>>, vector<1x4x4x128xbf16>
    %62 = vector.shape_cast %61 : vector<1x4x4x128xbf16> to vector<4x4x128xbf16>
    %63 = vector.shape_cast %62 : vector<4x4x128xbf16> to vector<16x128xbf16>
    %c4 = arith.constant 4 : index
    %c0_62 = arith.constant 0 : index
    %c0_63 = arith.constant 0 : index
    %64 = vector.load %arg4[%c4, %c0_62, %c0_63] : memref<9x128x128xbf16, #tpu.memory_space<vmem>>, vector<1x128x128xbf16>
    %65 = vector.shape_cast %64 : vector<1x128x128xbf16> to vector<128x128xbf16>
    %cst_64 = arith.constant dense<0.000000e+00> : vector<16x128xf32>
    %66 = tpu.matmul %63, %65, %cst_64 {dimension_numbers = #tpu.dot_dimension_numbers<[1], [0], [0], [1], [0, 0, 1, 1], [], []>} : vector<16x128xbf16>, vector<128x128xbf16>, vector<16x128xf32> -> vector<16x128xf32>
    %67 = arith.addf %60, %66 : vector<16x128xf32>
    %c1_65 = arith.constant 1 : index
    %c1_66 = arith.constant 1 : index
    %c1_67 = arith.constant 1 : index
    %c0_68 = arith.constant 0 : index
    %68 = vector.load %arg11[%c1_65, %c1_66, %c1_67, %c0_68] : memref<4x5x5x128xbf16, #tpu.memory_space<vmem>>, vector<1x4x4x128xbf16>
    %69 = vector.shape_cast %68 : vector<1x4x4x128xbf16> to vector<4x4x128xbf16>
    %70 = vector.shape_cast %69 : vector<4x4x128xbf16> to vector<16x128xbf16>
    %c5 = arith.constant 5 : index
    %c0_69 = arith.constant 0 : index
    %c0_70 = arith.constant 0 : index
    %71 = vector.load %arg4[%c5, %c0_69, %c0_70] : memref<9x128x128xbf16, #tpu.memory_space<vmem>>, vector<1x128x128xbf16>
    %72 = vector.shape_cast %71 : vector<1x128x128xbf16> to vector<128x128xbf16>
    %cst_71 = arith.constant dense<0.000000e+00> : vector<16x128xf32>
    %73 = tpu.matmul %70, %72, %cst_71 {dimension_numbers = #tpu.dot_dimension_numbers<[1], [0], [0], [1], [0, 0, 1, 1], [], []>} : vector<16x128xbf16>, vector<128x128xbf16>, vector<16x128xf32> -> vector<16x128xf32>
    %74 = arith.addf %67, %73 : vector<16x128xf32>
    %c3_72 = arith.constant 3 : index
    %c1_73 = arith.constant 1 : index
    %c0_74 = arith.constant 0 : index
    %c0_75 = arith.constant 0 : index
    %75 = vector.load %arg11[%c3_72, %c1_73, %c0_74, %c0_75] : memref<4x5x5x128xbf16, #tpu.memory_space<vmem>>, vector<1x4x4x128xbf16>
    %76 = vector.shape_cast %75 : vector<1x4x4x128xbf16> to vector<4x4x128xbf16>
    %77 = vector.shape_cast %76 : vector<4x4x128xbf16> to vector<16x128xbf16>
    %c6 = arith.constant 6 : index
    %c0_76 = arith.constant 0 : index
    %c0_77 = arith.constant 0 : index
    %78 = vector.load %arg4[%c6, %c0_76, %c0_77] : memref<9x128x128xbf16, #tpu.memory_space<vmem>>, vector<1x128x128xbf16>
    %79 = vector.shape_cast %78 : vector<1x128x128xbf16> to vector<128x128xbf16>
    %cst_78 = arith.constant dense<0.000000e+00> : vector<16x128xf32>
    %80 = tpu.matmul %77, %79, %cst_78 {dimension_numbers = #tpu.dot_dimension_numbers<[1], [0], [0], [1], [0, 0, 1, 1], [], []>} : vector<16x128xbf16>, vector<128x128xbf16>, vector<16x128xf32> -> vector<16x128xf32>
    %81 = arith.addf %74, %80 : vector<16x128xf32>
    %c2_79 = arith.constant 2 : index
    %c1_80 = arith.constant 1 : index
    %c1_81 = arith.constant 1 : index
    %c0_82 = arith.constant 0 : index
    %82 = vector.load %arg11[%c2_79, %c1_80, %c1_81, %c0_82] : memref<4x5x5x128xbf16, #tpu.memory_space<vmem>>, vector<1x4x4x128xbf16>
    %83 = vector.shape_cast %82 : vector<1x4x4x128xbf16> to vector<4x4x128xbf16>
    %84 = vector.shape_cast %83 : vector<4x4x128xbf16> to vector<16x128xbf16>
    %c7 = arith.constant 7 : index
    %c0_83 = arith.constant 0 : index
    %c0_84 = arith.constant 0 : index
    %85 = vector.load %arg4[%c7, %c0_83, %c0_84] : memref<9x128x128xbf16, #tpu.memory_space<vmem>>, vector<1x128x128xbf16>
    %86 = vector.shape_cast %85 : vector<1x128x128xbf16> to vector<128x128xbf16>
    %cst_85 = arith.constant dense<0.000000e+00> : vector<16x128xf32>
    %87 = tpu.matmul %84, %86, %cst_85 {dimension_numbers = #tpu.dot_dimension_numbers<[1], [0], [0], [1], [0, 0, 1, 1], [], []>} : vector<16x128xbf16>, vector<128x128xbf16>, vector<16x128xf32> -> vector<16x128xf32>
    %88 = arith.addf %81, %87 : vector<16x128xf32>
    %c3_86 = arith.constant 3 : index
    %c1_87 = arith.constant 1 : index
    %c1_88 = arith.constant 1 : index
    %c0_89 = arith.constant 0 : index
    %89 = vector.load %arg11[%c3_86, %c1_87, %c1_88, %c0_89] : memref<4x5x5x128xbf16, #tpu.memory_space<vmem>>, vector<1x4x4x128xbf16>
    %90 = vector.shape_cast %89 : vector<1x4x4x128xbf16> to vector<4x4x128xbf16>
    %91 = vector.shape_cast %90 : vector<4x4x128xbf16> to vector<16x128xbf16>
    %c8 = arith.constant 8 : index
    %c0_90 = arith.constant 0 : index
    %c0_91 = arith.constant 0 : index
    %92 = vector.load %arg4[%c8, %c0_90, %c0_91] : memref<9x128x128xbf16, #tpu.memory_space<vmem>>, vector<1x128x128xbf16>
    %93 = vector.shape_cast %92 : vector<1x128x128xbf16> to vector<128x128xbf16>
    %cst_92 = arith.constant dense<0.000000e+00> : vector<16x128xf32>
    %94 = tpu.matmul %91, %93, %cst_92 {dimension_numbers = #tpu.dot_dimension_numbers<[1], [0], [0], [1], [0, 0, 1, 1], [], []>} : vector<16x128xbf16>, vector<128x128xbf16>, vector<16x128xf32> -> vector<16x128xf32>
    %95 = arith.addf %88, %94 : vector<16x128xf32>
    %c0_93 = arith.constant 0 : index
    %c0_94 = arith.constant 0 : index
    %96 = vector.load %arg5[%c0_93, %c0_94] : memref<1x128xf32, #tpu.memory_space<vmem>>, vector<1x128xf32>
    %97 = vector.broadcast %96 : vector<1x128xf32> to vector<16x128xf32>
    %98 = arith.addf %95, %97 : vector<16x128xf32>
    %cst_95 = arith.constant 0.000000e+00 : f32
    %99 = vector.broadcast %cst_95 : f32 to vector<16x128xf32>
    %100 = arith.maximumf %98, %99 : vector<16x128xf32>
    %cst_96 = arith.constant dense<0.000000e+00> : vector<128xf32>
    %101 = vector.multi_reduction <add>, %100, %cst_96 [0] : vector<16x128xf32> to vector<128xf32>
    %102 = vector.shape_cast %101 : vector<128xf32> to vector<1x128xf32>
    %cst_97 = arith.constant 6.250000e-02 : f32
    %103 = vector.broadcast %cst_97 : f32 to vector<1x128xf32>
    %104 = arith.mulf %102, %103 : vector<1x128xf32>
    %105 = arith.truncf %104 : vector<1x128xf32> to vector<1x128xbf16>
    %c0_98 = arith.constant 0 : index
    %c0_99 = arith.constant 0 : index
    %106 = vector.load %arg6[%c0_98, %c0_99] : memref<128x128xbf16, #tpu.memory_space<vmem>>, vector<128x128xbf16>
    %cst_100 = arith.constant dense<0.000000e+00> : vector<1x128xf32>
    %107 = tpu.matmul %105, %106, %cst_100 {dimension_numbers = #tpu.dot_dimension_numbers<[1], [0], [0], [1], [0, 0, 1, 1], [], []>} : vector<1x128xbf16>, vector<128x128xbf16>, vector<1x128xf32> -> vector<1x128xf32>
    %c0_101 = arith.constant 0 : index
    %c0_102 = arith.constant 0 : index
    %108 = vector.load %arg7[%c0_101, %c0_102] : memref<1x128xf32, #tpu.memory_space<vmem>>, vector<1x128xf32>
    %109 = arith.addf %107, %108 : vector<1x128xf32>
    %cst_103 = arith.constant 0.000000e+00 : f32
    %110 = vector.broadcast %cst_103 : f32 to vector<1x128xf32>
    %111 = arith.maximumf %109, %110 : vector<1x128xf32>
    %c0_104 = arith.constant 0 : index
    %c0_105 = arith.constant 0 : index
    %112 = vector.load %arg8[%c0_104, %c0_105] : memref<1x128xf32, #tpu.memory_space<vmem>>, vector<1x128xf32>
    %113 = arith.mulf %111, %112 : vector<1x128xf32>
    %cst_106 = arith.constant dense<0.000000e+00> : vector<1xf32>
    %114 = vector.multi_reduction <add>, %113, %cst_106 [1] : vector<1x128xf32> to vector<1xf32>
    %115 = vector.shape_cast %114 : vector<1xf32> to vector<1x1xf32>
    %c0_107 = arith.constant 0 : index
    %c0_108 = arith.constant 0 : index
    %116 = vector.load %arg9[%c0_107, %c0_108] : memref<1x1xf32, #tpu.memory_space<vmem>>, vector<1x1xf32>
    %117 = arith.addf %115, %116 : vector<1x1xf32>
    %118 = vector.shape_cast %117 : vector<1x1xf32> to vector<1x1xf32>
    %119 = vector.broadcast %118 : vector<1x1xf32> to vector<1x128xf32>
    %c0_109 = arith.constant 0 : index
    %c0_110 = arith.constant 0 : index
    %c0_111 = arith.constant 0 : index
    %120 = vector.load %arg10[%c0_109, %c0_110, %c0_111] : memref<1x1x128xf32, #tpu.memory_space<vmem>>, vector<1x1x128xf32>
    %121 = vector.shape_cast %120 : vector<1x1x128xf32> to vector<1x128xf32>
    %122 = vector.shape_cast %119 : vector<1x128xf32> to vector<1x1x128xf32>
    tpu.vector_store %arg10[%c0_109, %c0_110, %c0_111], %122 {strides = array<i32>} : memref<1x1x128xf32, #tpu.memory_space<vmem>>, vector<1x1x128xf32>,
    return
  }
  func.func @transform_0(%arg0: i32) -> (i32, i32, i32) {
    %c0_i32 = arith.constant 0 : i32
    %c0_i32_0 = arith.constant 0 : i32
    %c0_i32_1 = arith.constant 0 : i32
    return %arg0, %c0_i32, %c0_i32_0 : i32, i32, i32
  }
  func.func @transform_1(%arg0: i32) -> (i32, i32) {
    %c0_i32 = arith.constant 0 : i32
    %c0_i32_0 = arith.constant 0 : i32
    %c0_i32_1 = arith.constant 0 : i32
    return %c0_i32, %c0_i32_0 : i32, i32
  }
  func.func @transform_2(%arg0: i32) -> (i32, i32) {
    %c0_i32 = arith.constant 0 : i32
    %c0_i32_0 = arith.constant 0 : i32
    %c0_i32_1 = arith.constant 0 : i32
    return %c0_i32, %c0_i32_0 : i32, i32
  }
  func.func @transform_3(%arg0: i32) -> (i32, i32, i32) {
    %c0_i32 = arith.constant 0 : i32
    %c0_i32_0 = arith.constant 0 : i32
    %c0_i32_1 = arith.constant 0 : i32
    %c0_i32_2 = arith.constant 0 : i32
    return %c0_i32, %c0_i32_0, %c0_i32_1 : i32, i32, i32
  }
  func.func @transform_4(%arg0: i32) -> (i32, i32) {
    %c0_i32 = arith.constant 0 : i32
    %c0_i32_0 = arith.constant 0 : i32
    %c0_i32_1 = arith.constant 0 : i32
    return %c0_i32, %c0_i32_0 : i32, i32
  }
  func.func @transform_5(%arg0: i32) -> (i32, i32) {
    %c0_i32 = arith.constant 0 : i32
    %c0_i32_0 = arith.constant 0 : i32
    %c0_i32_1 = arith.constant 0 : i32
    return %c0_i32, %c0_i32_0 : i32, i32
  }
  func.func @transform_6(%arg0: i32) -> (i32, i32) {
    %c0_i32 = arith.constant 0 : i32
    %c0_i32_0 = arith.constant 0 : i32
    %c0_i32_1 = arith.constant 0 : i32
    return %c0_i32, %c0_i32_0 : i32, i32
  }
  func.func @transform_7(%arg0: i32) -> (i32, i32) {
    %c0_i32 = arith.constant 0 : i32
    %c0_i32_0 = arith.constant 0 : i32
    %c0_i32_1 = arith.constant 0 : i32
    return %c0_i32, %c0_i32_0 : i32, i32
  }
  func.func @transform_8(%arg0: i32) -> (i32, i32) {
    %c0_i32 = arith.constant 0 : i32
    %c0_i32_0 = arith.constant 0 : i32
    %c0_i32_1 = arith.constant 0 : i32
    return %c0_i32, %c0_i32_0 : i32, i32
  }
  func.func @transform_9(%arg0: i32) -> (i32, i32, i32) {
    %c0_i32 = arith.constant 0 : i32
    %c0_i32_0 = arith.constant 0 : i32
    %c0_i32_1 = arith.constant 0 : i32
    return %arg0, %c0_i32, %c0_i32_0 : i32, i32, i32
  }
}

</mosaic_0001>

<llo_original>
// kernel: discriminative_forward.1
$region0: #{discriminative_forward.1}
  #allocation0 [shape = 'u32[]', space=smem, size = 0x4, offset = 0x4, fixed_abs, tag = 'smem constant byte address 0x4 - core index']
  #allocation1 [shape = 'u32[144,128]{1,0:T(1,128)}', space=vmem, size = 0x12000, scoped, tag = 'internal scratch']
  #allocation2 [shape = 'bf16[4,5,5,128]{3,2,1,0:T(8,128)(2,1)}', space=vmem, size = 0xa000, scoped, tag = 'scratch operand']
  #allocation3 [shape = 'f32[1,1]{1,0:T(1,128)S(1)}', space=vmem, size = 0x200, scoped, tag = 'scoped memory for discriminative_forward.1']
  %s0 = inlined_call_operand.vmem [shape: bf16[2,64,128], index: 0, kind: input, shape index: {}]
  %s1 = inlined_call_operand.vmem [shape: bf16[128,128], index: 1, kind: input, shape index: {}]
  %s2 = inlined_call_operand.vmem [shape: f32[1,128], index: 2, kind: input, shape index: {}]
  %s3 = inlined_call_operand.vmem [shape: bf16[9,128,128], index: 3, kind: input, shape index: {}]
  %s4 = inlined_call_operand.vmem [shape: f32[1,128], index: 4, kind: input, shape index: {}]
  %s5 = inlined_call_operand.vmem [shape: bf16[128,128], index: 5, kind: input, shape index: {}]
  %s6 = inlined_call_operand.vmem [shape: f32[1,128], index: 6, kind: input, shape index: {}]
  %s7 = inlined_call_operand.vmem [shape: f32[1,128], index: 7, kind: input, shape index: {}]
  %s8 = inlined_call_operand.<no memory space> [shape: f32[1,1], index: 8, kind: input, shape index: {}]
  %s9 = inlined_call_operand.vmem [shape: f32[2,1,128], index: 9, kind: output, shape index: {}]
  %s10 = sld [smem:[#allocation0]]
  $region69: #{discriminative_forward.1} parent=0
    _
  %s12 = ssub.s32 1, %s10
  %s13 = scalar_select 0, %s12, %s10
  %v14 = vstv %s8
  %15 = vst [vmem:[#allocation3] sm:$0x1] %v14
  loop: start=0, step=1, limit=4
  $region2: #{discriminative_forward.1} parent=0 // loop_pre_header
    _
  $region3: #{discriminative_forward.1} parent=0 // loop_header
    %s17 = sphi 0, %s21
    %p18 = scmp.ge.s32.totalorder %s17, 4
    %s27 = sphi 0, %s29
    %s30 = sphi 0, %s27
    %s31 = sphi 0, %s30
    %s47 = sphi 0, %s31
    %s51 = sphi 0, %s51
    %s53 = sphi 0, %s51
    %s54 = sphi 0, %s53
    %s68 = sphi 0, %s54
    %s72 = sphi 0, %s72
    %s74 = sphi 0, %s72
    %s75 = sphi 0, %s74
    %s89 = sphi 0, %s75
    %s93 = sphi 0, %s93
    %s95 = sphi 0, %s93
    %s96 = sphi 0, %s95
    %s110 = sphi 0, %s96
    %s114 = sphi 0, %s114
    %s116 = sphi 0, %s114
    %s117 = sphi 0, %s116
    %s131 = sphi 0, %s117
    %s135 = sphi 0, %s135
    %s137 = sphi 0, %s135
    %s138 = sphi 0, %s137
    %s152 = sphi 0, %s138
    %s156 = sphi 0, %s156
    %s158 = sphi 0, %s156
    %s159 = sphi 0, %s158
    %s173 = sphi 0, %s159
    %s177 = sphi 0, %s177
    %s179 = sphi 0, %s177
    %s180 = sphi 0, %s179
    %s194 = sphi 0, %s180
    %s198 = sphi 0, %s198
    %s200 = sphi 0, %s198
    %s201 = sphi 0, %s200
    %s215 = sphi 0, %s201
    %s221 = sphi 0, %s223
    %s224 = sphi 0, %s221
    %s225 = sphi 0, %s224
    %s241 = sphi 0, %s225
  $region4: #{discriminative_forward.1} parent=0 // loop_header_branch
    %20 = sbr.rel (%p18) target = $region8
  $region5: #{discriminative_forward.1} parent=0 // loop_body
    %s22 = ssub.s32 %s17, 1
    %s23 = ssub.s32 %s17, 2
    %s24 = sadd.s32 %s17, 1
    %s25 = ssub.s32 %s17, %s24
    %p26 = scmp.eq.s32.totalorder %s25, 0
    %s28 = sadd.s32 %s27, 1
    %s29 = scalar_select %p26, %s27, %s28
    %p32 = pneg %p26
    %p33 = scmp.eq.s32.totalorder %s17, 1
    %p34 = por %p32, %p33
    %p35 = scmp.ne.s32.totalorder %s27, %s30
    %p36 = scmp.eq.s32.totalorder %s17, 0
    %p37 = por %p35, %p36
    %p38 = scmp.ne.s32.totalorder %s27, %s30
    %p39 = scmp.eq.s32.totalorder %s22, 1
    %p40 = por %p38, %p39
    %p41 = scmp.ne.s32.totalorder %s30, %s31
    %p42 = scmp.eq.s32.totalorder %s22, 0
    %p43 = por %p41, %p42
    %p44 = scmp.ne.s32.totalorder %s30, %s31
    %p45 = scmp.eq.s32.totalorder %s23, 1
    %p46 = por %p44, %p45
    %p48 = scmp.ne.s32.totalorder %s31, %s47
    %p49 = scmp.eq.s32.totalorder %s23, 0
    %p50 = por %p48, %p49
    %s52 = sadd.s32 %s51, 1
    %p55 = scmp.eq.s32.totalorder %s17, 1
    %p56 = scmp.ne.s32.totalorder %s51, %s53
    %p57 = scmp.eq.s32.totalorder %s17, 0
    %p58 = por %p56, %p57
    %p59 = scmp.ne.s32.totalorder %s51, %s53
    %p60 = scmp.eq.s32.totalorder %s22, 1
    %p61 = por %p59, %p60
    %p62 = scmp.ne.s32.totalorder %s53, %s54
    %p63 = scmp.eq.s32.totalorder %s22, 0
    %p64 = por %p62, %p63
    %p65 = scmp.ne.s32.totalorder %s53, %s54
    %p66 = scmp.eq.s32.totalorder %s23, 1
    %p67 = por %p65, %p66
    %p69 = scmp.ne.s32.totalorder %s54, %s68
    %p70 = scmp.eq.s32.totalorder %s23, 0
    %p71 = por %p69, %p70
    %s73 = sadd.s32 %s72, 1
    %p76 = scmp.eq.s32.totalorder %s17, 1
    %p77 = scmp.ne.s32.totalorder %s72, %s74
    %p78 = scmp.eq.s32.totalorder %s17, 0
    %p79 = por %p77, %p78
    %p80 = scmp.ne.s32.totalorder %s72, %s74
    %p81 = scmp.eq.s32.totalorder %s22, 1
    %p82 = por %p80, %p81
    %p83 = scmp.ne.s32.totalorder %s74, %s75
    %p84 = scmp.eq.s32.totalorder %s22, 0
    %p85 = por %p83, %p84
    %p86 = scmp.ne.s32.totalorder %s74, %s75
    %p87 = scmp.eq.s32.totalorder %s23, 1
    %p88 = por %p86, %p87
    %p90 = scmp.ne.s32.totalorder %s75, %s89
    %p91 = scmp.eq.s32.totalorder %s23, 0
    %p92 = por %p90, %p91
    %s94 = sadd.s32 %s93, 1
    %p97 = scmp.eq.s32.totalorder %s17, 1
    %p98 = scmp.ne.s32.totalorder %s93, %s95
    %p99 = scmp.eq.s32.totalorder %s17, 0
    %p100 = por %p98, %p99
    %p101 = scmp.ne.s32.totalorder %s93, %s95
    %p102 = scmp.eq.s32.totalorder %s22, 1
    %p103 = por %p101, %p102
    %p104 = scmp.ne.s32.totalorder %s95, %s96
    %p105 = scmp.eq.s32.totalorder %s22, 0
    %p106 = por %p104, %p105
    %p107 = scmp.ne.s32.totalorder %s95, %s96
    %p108 = scmp.eq.s32.totalorder %s23, 1
    %p109 = por %p107, %p108
    %p111 = scmp.ne.s32.totalorder %s96, %s110
    %p112 = scmp.eq.s32.totalorder %s23, 0
    %p113 = por %p111, %p112
    %s115 = sadd.s32 %s114, 1
    %p118 = scmp.eq.s32.totalorder %s17, 1
    %p119 = scmp.ne.s32.totalorder %s114, %s116
    %p120 = scmp.eq.s32.totalorder %s17, 0
    %p121 = por %p119, %p120
    %p122 = scmp.ne.s32.totalorder %s114, %s116
    %p123 = scmp.eq.s32.totalorder %s22, 1
    %p124 = por %p122, %p123
    %p125 = scmp.ne.s32.totalorder %s116, %s117
    %p126 = scmp.eq.s32.totalorder %s22, 0
    %p127 = por %p125, %p126
    %p128 = scmp.ne.s32.totalorder %s116, %s117
    %p129 = scmp.eq.s32.totalorder %s23, 1
    %p130 = por %p128, %p129
    %p132 = scmp.ne.s32.totalorder %s117, %s131
    %p133 = scmp.eq.s32.totalorder %s23, 0
    %p134 = por %p132, %p133
    %s136 = sadd.s32 %s135, 1
    %p139 = scmp.eq.s32.totalorder %s17, 1
    %p140 = scmp.ne.s32.totalorder %s135, %s137
    %p141 = scmp.eq.s32.totalorder %s17, 0
    %p142 = por %p140, %p141
    %p143 = scmp.ne.s32.totalorder %s135, %s137
    %p144 = scmp.eq.s32.totalorder %s22, 1
    %p145 = por %p143, %p144
    %p146 = scmp.ne.s32.totalorder %s137, %s138
    %p147 = scmp.eq.s32.totalorder %s22, 0
    %p148 = por %p146, %p147
    %p149 = scmp.ne.s32.totalorder %s137, %s138
    %p150 = scmp.eq.s32.totalorder %s23, 1
    %p151 = por %p149, %p150
    %p153 = scmp.ne.s32.totalorder %s138, %s152
    %p154 = scmp.eq.s32.totalorder %s23, 0
    %p155 = por %p153, %p154
    %s157 = sadd.s32 %s156, 1
    %p160 = scmp.eq.s32.totalorder %s17, 1
    %p161 = scmp.ne.s32.totalorder %s156, %s158
    %p162 = scmp.eq.s32.totalorder %s17, 0
    %p163 = por %p161, %p162
    %p164 = scmp.ne.s32.totalorder %s156, %s158
    %p165 = scmp.eq.s32.totalorder %s22, 1
    %p166 = por %p164, %p165
    %p167 = scmp.ne.s32.totalorder %s158, %s159
    %p168 = scmp.eq.s32.totalorder %s22, 0
    %p169 = por %p167, %p168
    %p170 = scmp.ne.s32.totalorder %s158, %s159
    %p171 = scmp.eq.s32.totalorder %s23, 1
    %p172 = por %p170, %p171
    %p174 = scmp.ne.s32.totalorder %s159, %s173
    %p175 = scmp.eq.s32.totalorder %s23, 0
    %p176 = por %p174, %p175
    %s178 = sadd.s32 %s177, 1
    %p181 = scmp.eq.s32.totalorder %s17, 1
    %p182 = scmp.ne.s32.totalorder %s177, %s179
    %p183 = scmp.eq.s32.totalorder %s17, 0
    %p184 = por %p182, %p183
    %p185 = scmp.ne.s32.totalorder %s177, %s179
    %p186 = scmp.eq.s32.totalorder %s22, 1
    %p187 = por %p185, %p186
    %p188 = scmp.ne.s32.totalorder %s179, %s180
    %p189 = scmp.eq.s32.totalorder %s22, 0
    %p190 = por %p188, %p189
    %p191 = scmp.ne.s32.totalorder %s179, %s180
    %p192 = scmp.eq.s32.totalorder %s23, 1
    %p193 = por %p191, %p192
    %p195 = scmp.ne.s32.totalorder %s180, %s194
    %p196 = scmp.eq.s32.totalorder %s23, 0
    %p197 = por %p195, %p196
    %s199 = sadd.s32 %s198, 1
    %p202 = scmp.eq.s32.totalorder %s17, 1
    %p203 = scmp.ne.s32.totalorder %s198, %s200
    %p204 = scmp.eq.s32.totalorder %s17, 0
    %p205 = por %p203, %p204
    %p206 = scmp.ne.s32.totalorder %s198, %s200
    %p207 = scmp.eq.s32.totalorder %s22, 1
    %p208 = por %p206, %p207
    %p209 = scmp.ne.s32.totalorder %s200, %s201
    %p210 = scmp.eq.s32.totalorder %s22, 0
    %p211 = por %p209, %p210
    %p212 = scmp.ne.s32.totalorder %s200, %s201
    %p213 = scmp.eq.s32.totalorder %s23, 1
    %p214 = por %p212, %p213
    %p216 = scmp.ne.s32.totalorder %s201, %s215
    %p217 = scmp.eq.s32.totalorder %s23, 0
    %p218 = por %p216, %p217
    %s219 = ssub.s32 %s17, %s24
    %p220 = scmp.eq.s32.totalorder %s219, 0
    %s222 = sadd.s32 %s221, 1
    %s223 = scalar_select %p220, %s221, %s222
    %p226 = pneg %p220
    %p227 = scmp.eq.s32.totalorder %s17, 1
    %p228 = por %p226, %p227
    %p229 = scmp.ne.s32.totalorder %s221, %s224
    %p230 = scmp.eq.s32.totalorder %s17, 0
    %p231 = por %p229, %p230
    %p232 = scmp.ne.s32.totalorder %s221, %s224
    %p233 = scmp.eq.s32.totalorder %s22, 1
    %p234 = por %p232, %p233
    %p235 = scmp.ne.s32.totalorder %s224, %s225
    %p236 = scmp.eq.s32.totalorder %s22, 0
    %p237 = por %p235, %p236
    %p238 = scmp.ne.s32.totalorder %s224, %s225
    %p239 = scmp.eq.s32.totalorder %s23, 1
    %p240 = por %p238, %p239
    %p242 = scmp.ne.s32.totalorder %s225, %s241
    %p243 = scmp.eq.s32.totalorder %s23, 0
    %p244 = por %p242, %p243
    %p245 = scmp.le.s32.totalorder 1, %s17
    %p246 = scmp.lt.s32.totalorder %s17, 3
    %p247 = pnand %p245, %p246
    %p248 = pneg %p247
    // Predicated region
    $region9: #{discriminative_forward.1} parent=5 // pred_check
      _
    $region10: #{discriminative_forward.1} parent=5 // pred_check_branch
      %250 = sbr.rel (%p247) target = $region12
    $region11: #{discriminative_forward.1} parent=5 // pred_region
      %s251 = ssub.s32 %s17, 1
      // Predicated region
      $region13: #{discriminative_forward.1} parent=11 // pred_check
        %p252 = pneg %p64
      $region14: #{discriminative_forward.1} parent=11 // pred_check_branch
        %254 = sbr.rel (%p252) target = $region16
      $region15: #{discriminative_forward.1} parent=11 // pred_region
        _
      $region16: #{discriminative_forward.1} parent=11 // pred_fallthru
        _
      // Predicated region
      $region17: #{discriminative_forward.1} parent=11 // pred_check
        %p255 = pneg %p85
      $region18: #{discriminative_forward.1} parent=11 // pred_check_branch
        %257 = sbr.rel (%p255) target = $region20
      $region19: #{discriminative_forward.1} parent=11 // pred_region
        _
      $region20: #{discriminative_forward.1} parent=11 // pred_fallthru
        _
      // Predicated region
      $region21: #{discriminative_forward.1} parent=11 // pred_check
        %p258 = pneg %p106
      $region22: #{discriminative_forward.1} parent=11 // pred_check_branch
        %260 = sbr.rel (%p258) target = $region24
      $region23: #{discriminative_forward.1} parent=11 // pred_region
        _
      $region24: #{discriminative_forward.1} parent=11 // pred_fallthru
        _
      // Predicated region
      $region25: #{discriminative_forward.1} parent=11 // pred_check
        %p261 = pneg %p127
      $region26: #{discriminative_forward.1} parent=11 // pred_check_branch
        %263 = sbr.rel (%p261) target = $region28
      $region27: #{discriminative_forward.1} parent=11 // pred_region
        _
      $region28: #{discriminative_forward.1} parent=11 // pred_fallthru
        _
      // Predicated region
      $region29: #{discriminative_forward.1} parent=11 // pred_check
        %p264 = pneg %p148
      $region30: #{discriminative_forward.1} parent=11 // pred_check_branch
        %266 = sbr.rel (%p264) target = $region32
      $region31: #{discriminative_forward.1} parent=11 // pred_region
        _
      $region32: #{discriminative_forward.1} parent=11 // pred_fallthru
        _
      // Predicated region
      $region33: #{discriminative_forward.1} parent=11 // pred_check
        %p267 = pneg %p169
      $region34: #{discriminative_forward.1} parent=11 // pred_check_branch
        %269 = sbr.rel (%p267) target = $region36
      $region35: #{discriminative_forward.1} parent=11 // pred_region
        _
      $region36: #{discriminative_forward.1} parent=11 // pred_fallthru
        _
      // Predicated region
      $region37: #{discriminative_forward.1} parent=11 // pred_check
        %p270 = pneg %p190
      $region38: #{discriminative_forward.1} parent=11 // pred_check_branch
        %272 = sbr.rel (%p270) target = $region40
      $region39: #{discriminative_forward.1} parent=11 // pred_region
        _
      $region40: #{discriminative_forward.1} parent=11 // pred_fallthru
        _
      // Predicated region
      $region41: #{discriminative_forward.1} parent=11 // pred_check
        %p273 = pneg %p211
      $region42: #{discriminative_forward.1} parent=11 // pred_check_branch
        %275 = sbr.rel (%p273) target = $region44
      $region43: #{discriminative_forward.1} parent=11 // pred_region
        _
      $region44: #{discriminative_forward.1} parent=11 // pred_fallthru
        _
    $region12: #{discriminative_forward.1} parent=5 // pred_fallthru
      _
    %p276 = scmp.lt.s32.totalorder %s17, 2
    // Predicated region
    $region45: #{discriminative_forward.1} parent=5 // pred_check
      %p277 = pneg %p276
    $region46: #{discriminative_forward.1} parent=5 // pred_check_branch
      %279 = sbr.rel (%p277) target = $region48
    $region47: #{discriminative_forward.1} parent=5 // pred_region
      // Predicated region
      $region49: #{discriminative_forward.1} parent=47 // pred_check
        %p280 = pneg %p37
      $region50: #{discriminative_forward.1} parent=47 // pred_check_branch
        %282 = sbr.rel (%p280) target = $region52
      $region51: #{discriminative_forward.1} parent=47 // pred_region
        %p283 = scmp.lt.s32.totalorder %s17, 1
        %s284 = scalar_select %p283, %s17, 1
        %s285 = smul.addr %s284, 8
        %s286 = smul.addr %s285, 4
        %s287 = scalar_lea.vmem %s0, %s286
      $region52: #{discriminative_forward.1} parent=47 // pred_fallthru
        _
    $region48: #{discriminative_forward.1} parent=5 // pred_fallthru
      _
    %p288 = scmp.le.s32.totalorder 1, %s17
    %p289 = scmp.lt.s32.totalorder %s17, 3
    %p290 = pnand %p288, %p289
    %p291 = pneg %p290
    // Predicated region
    $region53: #{discriminative_forward.1} parent=5 // pred_check
      _
    $region54: #{discriminative_forward.1} parent=5 // pred_check_branch
      %293 = sbr.rel (%p290) target = $region56
    $region55: #{discriminative_forward.1} parent=5 // pred_region
      %s294 = ssub.s32 %s17, 1
      %p295 = scmp.lt.s32.totalorder %s22, 1
      %s296 = scalar_select %p295, %s22, 1
      %s297 = smul.addr %s296, 8
      %s298 = smul.addr %s297, 4
      %s299 = scalar_lea.vmem %s0, %s298
      %p300 = pneg %p43
      %p301 = pneg %p40
      %p302 = pneg %p64
      %p303 = pneg %p61
      %p304 = pneg %p85
      %p305 = pneg %p82
      %p306 = pneg %p106
      %p307 = pneg %p103
      %p308 = pneg %p127
      %p309 = pneg %p124
      %p310 = pneg %p148
      %p311 = pneg %p145
      %p312 = pneg %p169
      %p313 = pneg %p166
      %p314 = pneg %p190
      %p315 = pneg %p187
      %p316 = pneg %p211
      %p317 = pneg %p208
      %p318 = pneg %p237
      %p319 = pneg %p234
      %p320 = scmp.lt.s32.totalorder %s22, 1
      %s321 = scalar_select %p320, %s22, 1
      %s322 = scalar_lea.vmem %s9, %s321
      %p323 = scmp.lt.s32.totalorder %s22, 1
      %s324 = scalar_select %p323, %s22, 1
      %s325 = smul.addr %s324, 8
      %s326 = smul.addr %s325, 4
      %s327 = scalar_lea.vmem %s0, %s326
      %p328 = scmp.lt.s32.totalorder %s22, 1
      %s329 = scalar_select %p328, %s22, 1
      %s330 = scalar_lea.vmem %s9, %s329
      %v332 = vld [vmem:[%s327] sm:$0xf]
      %v333 = vld [vmem:[%s327 + $0x4] sm:$0xf]
      %v334 = vld [vmem:[%s327 + $0x8] sm:$0xf]
      %v335 = vld [vmem:[%s327 + $0xc] sm:$0xf]
      %v336 = vld [vmem:[%s327 + $0x10] sm:$0xf]
      %v337 = vld [vmem:[%s327 + $0x14] sm:$0xf]
      %v338 = vld [vmem:[%s327 + $0x18] sm:$0xf]
      %v339 = vld [vmem:[%s327 + $0x1c] sm:$0xf]
      %v340 = vld [vmem:[%s1] sm:$0xf]
      %v341 = vld [vmem:[%s1 + $0x4] sm:$0xf]
      %v342 = vld [vmem:[%s1 + $0x8] sm:$0xf]
      %v343 = vld [vmem:[%s1 + $0xc] sm:$0xf]
      %v344 = vld [vmem:[%s1 + $0x10] sm:$0xf]
      %v345 = vld [vmem:[%s1 + $0x14] sm:$0xf]
      %v346 = vld [vmem:[%s1 + $0x18] sm:$0xf]
      %v347 = vld [vmem:[%s1 + $0x1c] sm:$0xf]
      %v348 = vld [vmem:[%s1 + $0x20] sm:$0xf]
      %v349 = vld [vmem:[%s1 + $0x24] sm:$0xf]
      %v350 = vld [vmem:[%s1 + $0x28] sm:$0xf]
      %v351 = vld [vmem:[%s1 + $0x2c] sm:$0xf]
      %v352 = vld [vmem:[%s1 + $0x30] sm:$0xf]
      %v353 = vld [vmem:[%s1 + $0x34] sm:$0xf]
      %v354 = vld [vmem:[%s1 + $0x38] sm:$0xf]
      %v355 = vld [vmem:[%s1 + $0x3c] sm:$0xf]
      %v356 = vld [vmem:[%s2] sm:$0x1]
      %v358 = vlaneseq
      %v359 = vshrl.u32 %v358, 7
      %v360 = vsub.s32 0, %v359
      %v361 = vrot.slane %v356, %v360
      %v371 = vunpack.c.l.b16 %v332
      %v372 = vunpack.c.l.b16 %v333
      %v373 = vunpack.c.l.b16 %v334
      %v374 = vunpack.c.l.b16 %v335
      %v375 = vunpack.c.l.b16 %v336
      %v376 = vunpack.c.l.b16 %v337
      %v377 = vunpack.c.l.b16 %v338
      %v378 = vunpack.c.l.b16 %v339
      %v379 = vpack.c.b16 %v372, %v371
      %v380 = vpack.c.b16 %v374, %v373
      %v381 = vpack.c.b16 %v376, %v375
      %v382 = vpack.c.b16 %v378, %v377
      %v403 = vunpack.c.l.b16 %v340
      %v404 = vunpack.c.l.b16 %v341
      %v405 = vunpack.c.l.b16 %v342
      %v406 = vunpack.c.l.b16 %v343
      %v407 = vunpack.c.l.b16 %v344
      %v408 = vunpack.c.l.b16 %v345
      %v409 = vunpack.c.l.b16 %v346
      %v410 = vunpack.c.l.b16 %v347
      %v411 = vunpack.c.l.b16 %v348
      %v412 = vunpack.c.l.b16 %v349
      %v413 = vunpack.c.l.b16 %v350
      %v414 = vunpack.c.l.b16 %v351
      %v415 = vunpack.c.l.b16 %v352
      %v416 = vunpack.c.l.b16 %v353
      %v417 = vunpack.c.l.b16 %v354
      %v418 = vunpack.c.l.b16 %v355
      %v419 = vpack.c.b16 %v404, %v403
      %v420 = vpack.c.b16 %v406, %v405
      %v421 = vpack.c.b16 %v408, %v407
      %v422 = vpack.c.b16 %v410, %v409
      %v423 = vpack.c.b16 %v412, %v411
      %v424 = vpack.c.b16 %v414, %v413
      %v425 = vpack.c.b16 %v416, %v415
      %v426 = vpack.c.b16 %v418, %v417
      %435 = vmatprep.subr.bf16.mxu0 0
      %436 = vmatpush1.bf16.msra.mxu0 %v419
      %437 = vmatprep.subr.bf16.mxu0 0
      %438 = vmatpush1.bf16.msra.mxu0 %v420
      %439 = vmatprep.subr.bf16.mxu0 0
      %440 = vmatpush1.bf16.msra.mxu0 %v421
      %441 = vmatprep.subr.bf16.mxu0 0
      %442 = vmatpush1.bf16.msra.mxu0 %v422
      %443 = vmatprep.subr.bf16.mxu0 0
      %444 = vmatpush1.bf16.msra.mxu0 %v423
      %445 = vmatprep.subr.bf16.mxu0 0
      %446 = vmatpush1.bf16.msra.mxu0 %v424
      %447 = vmatprep.subr.bf16.mxu0 0
      %448 = vmatpush1.bf16.msra.mxu0 %v425
      %449 = vmatprep.subr.bf16.mxu0 0
      %450 = vmatpush1.bf16.msra.mxu0 %v426
      %451 = vmatprep.subr.bf16.mxu0 0
      %452 = vmatpush1.bf16.msra.mxu0 0
      %453 = vmatprep.subr.bf16.mxu0 0
      %454 = vmatpush1.bf16.msra.mxu0 0
      %455 = vmatprep.subr.bf16.mxu0 0
      %456 = vmatpush1.bf16.msra.mxu0 0
      %457 = vmatprep.subr.bf16.mxu0 0
      %458 = vmatpush1.bf16.msra.mxu0 0
      %459 = vmatprep.subr.bf16.mxu0 0
      %460 = vmatpush1.bf16.msra.mxu0 0
      %461 = vmatprep.subr.bf16.mxu0 0
      %462 = vmatpush1.bf16.msra.mxu0 0
      %463 = vmatprep.subr.bf16.mxu0 0
      %464 = vmatpush1.bf16.msra.mxu0 0
      %465 = vmatprep.subr.bf16.mxu0 0
      %466 = vmatpush1.bf16.msra.mxu0 0
      %467 = vmatprep.mubr.bf16.mxu0 0
      %468 = vmatmul.mubr.bf16.gmra.mrb[0].mxu0 %v379
      %v469 = vpop.f32.mrb[0].mxu0
      %v470 = vadd.f32 %v361, %v469
      %v471 = vpop.f32.mrb[0].mxu0
      %v472 = vpop.f32.mrb[0].mxu0
      %v473 = vadd.f32 %v361, %v472
      %v474 = vpop.f32.mrb[0].mxu0
      %475 = vmatprep.mubr.bf16.mxu0 0
      %476 = vmatmul.mubr.bf16.gmra.mrb[0].mxu0 %v380
      %v477 = vpop.f32.mrb[0].mxu0
      %v478 = vadd.f32 %v361, %v477
      %v479 = vpop.f32.mrb[0].mxu0
      %v480 = vpop.f32.mrb[0].mxu0
      %v481 = vadd.f32 %v361, %v480
      %v482 = vpop.f32.mrb[0].mxu0
      %483 = vmatprep.mubr.bf16.mxu0 0
      %484 = vmatmul.mubr.bf16.gmra.mrb[0].mxu0 %v381
      %v485 = vpop.f32.mrb[0].mxu0
      %v486 = vadd.f32 %v361, %v485
      %v487 = vpop.f32.mrb[0].mxu0
      %v488 = vpop.f32.mrb[0].mxu0
      %v489 = vadd.f32 %v361, %v488
      %v490 = vpop.f32.mrb[0].mxu0
      %491 = vmatprep.mubr.bf16.mxu0 0
      %492 = vmatmul.mubr.bf16.gmra.mrb[0].mxu0 %v382
      %v493 = vpop.f32.mrb[0].mxu0
      %v494 = vadd.f32 %v361, %v493
      %v495 = vpop.f32.mrb[0].mxu0
      %v496 = vpop.f32.mrb[0].mxu0
      %v497 = vadd.f32 %v361, %v496
      %v498 = vpop.f32.mrb[0].mxu0
      %499 = vdwg.mxu0
      %v500 = vmax.f32 %v470, 0.0
      %v501 = vmax.f32 %v473, 0.0
      %v502 = vmax.f32 %v478, 0.0
      %v503 = vmax.f32 %v481, 0.0
      %v504 = vmax.f32 %v486, 0.0
      %v505 = vmax.f32 %v489, 0.0
      %v506 = vmax.f32 %v494, 0.0
      %v507 = vmax.f32 %v497, 0.0
      %v508 = vpack.c.bf16 %v501, %v500
      %v509 = vpack.c.bf16 %v503, %v502
      %v510 = vpack.c.bf16 %v505, %v504
      %v511 = vpack.c.bf16 %v507, %v506
      %vm512 = vcmask 1042432
      %vm513 = vsmask.f32 2304
      %vm514 = vmand %vm512, %vm513
      %v515 = vld [vmem:[#allocation2] sm:$0x7]
      %v516 = vsel %vm514, 0, %v515
      %517 = vst [vmem:[#allocation2] sm:$0x7] %v516
      %v518 = vld [vmem:[#allocation2 + $0x4] sm:$0x7]
      %v519 = vsel %vm514, 0, %v518
      %520 = vst [vmem:[#allocation2 + $0x4] sm:$0x7] %v519
      %v521 = vld [vmem:[#allocation2 + $0x8] sm:$0x7]
      %v522 = vsel %vm514, 0, %v521
      %523 = vst [vmem:[#allocation2 + $0x8] sm:$0x7] %v522
      %v524 = vld [vmem:[#allocation2 + $0xc] sm:$0x7]
      %v525 = vsel %vm514, 0, %v524
      %526 = vst [vmem:[#allocation2 + $0xc] sm:$0x7] %v525
      %v527 = vld [vmem:[#allocation2 + $0x10] sm:$0x7]
      %v528 = vsel %vm514, 0, %v527
      %529 = vst [vmem:[#allocation2 + $0x10] sm:$0x7] %v528
      %v530 = vld [vmem:[#allocation2 + $0x14] sm:$0x7]
      %v531 = vsel %vm514, 0, %v530
      %532 = vst [vmem:[#allocation2 + $0x14] sm:$0x7] %v531
      %v533 = vld [vmem:[#allocation2 + $0x18] sm:$0x7]
      %v534 = vsel %vm514, 0, %v533
      %535 = vst [vmem:[#allocation2 + $0x18] sm:$0x7] %v534
      %v536 = vld [vmem:[#allocation2 + $0x1c] sm:$0x7]
      %v537 = vsel %vm514, 0, %v536
      %538 = vst [vmem:[#allocation2 + $0x1c] sm:$0x7] %v537
      %v539 = vld [vmem:[#allocation2 + $0x20] sm:$0x7]
      %v540 = vsel %vm514, 0, %v539
      %541 = vst [vmem:[#allocation2 + $0x20] sm:$0x7] %v540
      %v542 = vld [vmem:[#allocation2 + $0x24] sm:$0x7]
      %v543 = vsel %vm514, 0, %v542
      %544 = vst [vmem:[#allocation2 + $0x24] sm:$0x7] %v543
      %v545 = vld [vmem:[#allocation2 + $0x28] sm:$0x7]
      %v546 = vsel %vm514, 0, %v545
      %547 = vst [vmem:[#allocation2 + $0x28] sm:$0x7] %v546
      %v548 = vld [vmem:[#allocation2 + $0x2c] sm:$0x7]
      %v549 = vsel %vm514, 0, %v548
      %550 = vst [vmem:[#allocation2 + $0x2c] sm:$0x7] %v549
      %v551 = vld [vmem:[#allocation2 + $0x30] sm:$0x7]
      %v552 = vsel %vm514, 0, %v551
      %553 = vst [vmem:[#allocation2 + $0x30] sm:$0x7] %v552
      %v554 = vld [vmem:[#allocation2 + $0x34] sm:$0x7]
      %v555 = vsel %vm514, 0, %v554
      %556 = vst [vmem:[#allocation2 + $0x34] sm:$0x7] %v555
      %v557 = vld [vmem:[#allocation2 + $0x38] sm:$0x7]
      %v558 = vsel %vm514, 0, %v557
      %559 = vst [vmem:[#allocation2 + $0x38] sm:$0x7] %v558
      %v560 = vld [vmem:[#allocation2 + $0x3c] sm:$0x7]
      %v561 = vsel %vm514, 0, %v560
      %562 = vst [vmem:[#allocation2 + $0x3c] sm:$0x7] %v561
      %v563 = vld [vmem:[#allocation2 + $0x40] sm:$0x7]
      %v564 = vsel %vm514, 0, %v563
      %565 = vst [vmem:[#allocation2 + $0x40] sm:$0x7] %v564
      %v566 = vld [vmem:[#allocation2 + $0x44] sm:$0x7]
      %v567 = vsel %vm514, 0, %v566
      %568 = vst [vmem:[#allocation2 + $0x44] sm:$0x7] %v567
      %v569 = vld [vmem:[#allocation2 + $0x48] sm:$0x7]
      %v570 = vsel %vm514, 0, %v569
      %571 = vst [vmem:[#allocation2 + $0x48] sm:$0x7] %v570
      %v572 = vld [vmem:[#allocation2 + $0x4c] sm:$0x7]
      %v573 = vsel %vm514, 0, %v572
      %574 = vst [vmem:[#allocation2 + $0x4c] sm:$0x7] %v573
      %v576 = vcombine.high %v508, %v508
      %v578 = vunpack.c.l.s4 1983009808
      %v579 = vunpack.c.0.s8 %v578
      %v580 = vlaneseq
      %v581 = vshrl.u32 %v580, 7
      %v582 = vsub.s32 %v579, %v581
      %v583 = vrot.slane %v508, %v582
      %v585 = vunpack.c.l.s4 1983009808
      %v586 = vunpack.c.0.s8 %v585
      %v587 = vlaneseq
      %v588 = vshrl.u32 %v587, 7
      %v589 = vsub.s32 %v586, %v588
      %v590 = vrot.slane %v576, %v589
      %v591 = vcombine.high %v583, %v583
      %v592 = vcombine.high %v590, %v590
      %v594 = vunpack.c.l.s4 1983009808
      %v595 = vunpack.c.0.s8 %v594
      %v596 = vlaneseq
      %v597 = vshrl.u32 %v596, 7
      %v598 = vsub.s32 %v595, %v597
      %v599 = vrot.slane %v583, %v598
      %v601 = vunpack.c.l.s4 1983009808
      %v602 = vunpack.c.0.s8 %v601
      %v603 = vlaneseq
      %v604 = vshrl.u32 %v603, 7
      %v605 = vsub.s32 %v602, %v604
      %v606 = vrot.slane %v591, %v605
      %v608 = vunpack.c.l.s4 1983009808
      %v609 = vunpack.c.0.s8 %v608
      %v610 = vlaneseq
      %v611 = vshrl.u32 %v610, 7
      %v612 = vsub.s32 %v609, %v611
      %v613 = vrot.slane %v590, %v612
      %v615 = vunpack.c.l.s4 1983009808
      %v616 = vunpack.c.0.s8 %v615
      %v617 = vlaneseq
      %v618 = vshrl.u32 %v617, 7
      %v619 = vsub.s32 %v616, %v618
      %v620 = vrot.slane %v592, %v619
      %v622 = vshrl.u32 %v599, 16
      %v624 = vrot.slane %v622, 7
      %v625 = vshll.u32 %v599, 16
      %v627 = vor.u32 %v624, %v625
      %v629 = vshrl.u32 %v606, 16
      %v631 = vrot.slane %v629, 7
      %v632 = vshll.u32 %v606, 16
      %v634 = vor.u32 %v631, %v632
      %v636 = vshrl.u32 %v613, 16
      %v638 = vrot.slane %v636, 7
      %v639 = vshll.u32 %v613, 16
      %v641 = vor.u32 %v638, %v639
      %v643 = vshrl.u32 %v620, 16
      %v645 = vrot.slane %v643, 7
      %v646 = vshll.u32 %v620, 16
      %v648 = vor.u32 %v645, %v646
      %s653 = scalar_lea.vmem [#allocation2], 4
      %vm654 = vsmask.f32 2306
      %vm655 = vmand %vm512, %vm654
      %v656 = vld [vmem:[%s653] sm:$0x7]
      %v657 = vsel %vm655, %v627, %v656
      %658 = vst [vmem:[%s653] sm:$0x7] %v657
      %v659 = vld [vmem:[%s653 + $0x4] sm:$0x7]
      %v660 = vsel %vm655, %v634, %v659
      %661 = vst [vmem:[%s653 + $0x4] sm:$0x7] %v660
      %v662 = vld [vmem:[%s653 + $0x8] sm:$0x7]
      %v663 = vsel %vm655, %v641, %v662
      %664 = vst [vmem:[%s653 + $0x8] sm:$0x7] %v663
      %v665 = vld [vmem:[%s653 + $0xc] sm:$0x7]
      %v666 = vsel %vm655, %v648, %v665
      %667 = vst [vmem:[%s653 + $0xc] sm:$0x7] %v666
      %v669 = vcombine.high %v509, %v509
      %v671 = vunpack.c.l.s4 1983009808
      %v672 = vunpack.c.0.s8 %v671
      %v673 = vlaneseq
      %v674 = vshrl.u32 %v673, 7
      %v675 = vsub.s32 %v672, %v674
      %v676 = vrot.slane %v509, %v675
      %v678 = vunpack.c.l.s4 1983009808
      %v679 = vunpack.c.0.s8 %v678
      %v680 = vlaneseq
      %v681 = vshrl.u32 %v680, 7
      %v682 = vsub.s32 %v679, %v681
      %v683 = vrot.slane %v669, %v682
      %v684 = vcombine.high %v676, %v676
      %v685 = vcombine.high %v683, %v683
      %v687 = vunpack.c.l.s4 1983009808
      %v688 = vunpack.c.0.s8 %v687
      %v689 = vlaneseq
      %v690 = vshrl.u32 %v689, 7
      %v691 = vsub.s32 %v688, %v690
      %v692 = vrot.slane %v676, %v691
      %v694 = vunpack.c.l.s4 1983009808
      %v695 = vunpack.c.0.s8 %v694
      %v696 = vlaneseq
      %v697 = vshrl.u32 %v696, 7
      %v698 = vsub.s32 %v695, %v697
      %v699 = vrot.slane %v684, %v698
      %v701 = vunpack.c.l.s4 1983009808
      %v702 = vunpack.c.0.s8 %v701
      %v703 = vlaneseq
      %v704 = vshrl.u32 %v703, 7
      %v705 = vsub.s32 %v702, %v704
      %v706 = vrot.slane %v683, %v705
      %v708 = vunpack.c.l.s4 1983009808
      %v709 = vunpack.c.0.s8 %v708
      %v710 = vlaneseq
      %v711 = vshrl.u32 %v710, 7
      %v712 = vsub.s32 %v709, %v711
      %v713 = vrot.slane %v685, %v712
      %v715 = vshrl.u32 %v692, 16
      %v717 = vrot.slane %v715, 7
      %v718 = vshll.u32 %v692, 16
      %v720 = vor.u32 %v717, %v718
      %v722 = vshrl.u32 %v699, 16
      %v724 = vrot.slane %v722, 7
      %v725 = vshll.u32 %v699, 16
      %v727 = vor.u32 %v724, %v725
      %v729 = vshrl.u32 %v706, 16
      %v731 = vrot.slane %v729, 7
      %v732 = vshll.u32 %v706, 16
      %v734 = vor.u32 %v731, %v732
      %v736 = vshrl.u32 %v713, 16
      %v738 = vrot.slane %v736, 7
      %v739 = vshll.u32 %v713, 16
      %v741 = vor.u32 %v738, %v739
      %s746 = scalar_lea.vmem [#allocation2], 24
      %v747 = vld [vmem:[%s746] sm:$0x7]
      %v748 = vsel %vm655, %v720, %v747
      %749 = vst [vmem:[%s746] sm:$0x7] %v748
      %v750 = vld [vmem:[%s746 + $0x4] sm:$0x7]
      %v751 = vsel %vm655, %v727, %v750
      %752 = vst [vmem:[%s746 + $0x4] sm:$0x7] %v751
      %v753 = vld [vmem:[%s746 + $0x8] sm:$0x7]
      %v754 = vsel %vm655, %v734, %v753
      %755 = vst [vmem:[%s746 + $0x8] sm:$0x7] %v754
      %v756 = vld [vmem:[%s746 + $0xc] sm:$0x7]
      %v757 = vsel %vm655, %v741, %v756
      %758 = vst [vmem:[%s746 + $0xc] sm:$0x7] %v757
      %v760 = vcombine.high %v510, %v510
      %v762 = vunpack.c.l.s4 1983009808
      %v763 = vunpack.c.0.s8 %v762
      %v764 = vlaneseq
      %v765 = vshrl.u32 %v764, 7
      %v766 = vsub.s32 %v763, %v765
      %v767 = vrot.slane %v510, %v766
      %v769 = vunpack.c.l.s4 1983009808
      %v770 = vunpack.c.0.s8 %v769
      %v771 = vlaneseq
      %v772 = vshrl.u32 %v771, 7
      %v773 = vsub.s32 %v770, %v772
      %v774 = vrot.slane %v760, %v773
      %v775 = vcombine.high %v767, %v767
      %v776 = vcombine.high %v774, %v774
      %v778 = vunpack.c.l.s4 1983009808
      %v779 = vunpack.c.0.s8 %v778
      %v780 = vlaneseq
      %v781 = vshrl.u32 %v780, 7
      %v782 = vsub.s32 %v779, %v781
      %v783 = vrot.slane %v767, %v782
      %v785 = vunpack.c.l.s4 1983009808
      %v786 = vunpack.c.0.s8 %v785
      %v787 = vlaneseq
      %v788 = vshrl.u32 %v787, 7
      %v789 = vsub.s32 %v786, %v788
      %v790 = vrot.slane %v775, %v789
      %v792 = vunpack.c.l.s4 1983009808
      %v793 = vunpack.c.0.s8 %v792
      %v794 = vlaneseq
      %v795 = vshrl.u32 %v794, 7
      %v796 = vsub.s32 %v793, %v795
      %v797 = vrot.slane %v774, %v796
      %v799 = vunpack.c.l.s4 1983009808
      %v800 = vunpack.c.0.s8 %v799
      %v801 = vlaneseq
      %v802 = vshrl.u32 %v801, 7
      %v803 = vsub.s32 %v800, %v802
      %v804 = vrot.slane %v776, %v803
      %v806 = vshrl.u32 %v783, 16
      %v808 = vrot.slane %v806, 7
      %v809 = vshll.u32 %v783, 16
      %v811 = vor.u32 %v808, %v809
      %v813 = vshrl.u32 %v790, 16
      %v815 = vrot.slane %v813, 7
      %v816 = vshll.u32 %v790, 16
      %v818 = vor.u32 %v815, %v816
      %v820 = vshrl.u32 %v797, 16
      %v822 = vrot.slane %v820, 7
      %v823 = vshll.u32 %v797, 16
      %v825 = vor.u32 %v822, %v823
      %v827 = vshrl.u32 %v804, 16
      %v829 = vrot.slane %v827, 7
      %v830 = vshll.u32 %v804, 16
      %v832 = vor.u32 %v829, %v830
      %s837 = scalar_lea.vmem [#allocation2], 44
      %v838 = vld [vmem:[%s837] sm:$0x7]
      %v839 = vsel %vm655, %v811, %v838
      %840 = vst [vmem:[%s837] sm:$0x7] %v839
      %v841 = vld [vmem:[%s837 + $0x4] sm:$0x7]
      %v842 = vsel %vm655, %v818, %v841
      %843 = vst [vmem:[%s837 + $0x4] sm:$0x7] %v842
      %v844 = vld [vmem:[%s837 + $0x8] sm:$0x7]
      %v845 = vsel %vm655, %v825, %v844
      %846 = vst [vmem:[%s837 + $0x8] sm:$0x7] %v845
      %v847 = vld [vmem:[%s837 + $0xc] sm:$0x7]
      %v848 = vsel %vm655, %v832, %v847
      %849 = vst [vmem:[%s837 + $0xc] sm:$0x7] %v848
      %v851 = vcombine.high %v511, %v511
      %v853 = vunpack.c.l.s4 1983009808
      %v854 = vunpack.c.0.s8 %v853
      %v855 = vlaneseq
      %v856 = vshrl.u32 %v855, 7
      %v857 = vsub.s32 %v854, %v856
      %v858 = vrot.slane %v511, %v857
      %v860 = vunpack.c.l.s4 1983009808
      %v861 = vunpack.c.0.s8 %v860
      %v862 = vlaneseq
      %v863 = vshrl.u32 %v862, 7
      %v864 = vsub.s32 %v861, %v863
      %v865 = vrot.slane %v851, %v864
      %v866 = vcombine.high %v858, %v858
      %v867 = vcombine.high %v865, %v865
      %v869 = vunpack.c.l.s4 1983009808
      %v870 = vunpack.c.0.s8 %v869
      %v871 = vlaneseq
      %v872 = vshrl.u32 %v871, 7
      %v873 = vsub.s32 %v870, %v872
      %v874 = vrot.slane %v858, %v873
      %v876 = vunpack.c.l.s4 1983009808
      %v877 = vunpack.c.0.s8 %v876
      %v878 = vlaneseq
      %v879 = vshrl.u32 %v878, 7
      %v880 = vsub.s32 %v877, %v879
      %v881 = vrot.slane %v866, %v880
      %v883 = vunpack.c.l.s4 1983009808
      %v884 = vunpack.c.0.s8 %v883
      %v885 = vlaneseq
      %v886 = vshrl.u32 %v885, 7
      %v887 = vsub.s32 %v884, %v886
      %v888 = vrot.slane %v865, %v887
      %v890 = vunpack.c.l.s4 1983009808
      %v891 = vunpack.c.0.s8 %v890
      %v892 = vlaneseq
      %v893 = vshrl.u32 %v892, 7
      %v894 = vsub.s32 %v891, %v893
      %v895 = vrot.slane %v867, %v894
      %v897 = vshrl.u32 %v874, 16
      %v899 = vrot.slane %v897, 7
      %v900 = vshll.u32 %v874, 16
      %v902 = vor.u32 %v899, %v900
      %v904 = vshrl.u32 %v881, 16
      %v906 = vrot.slane %v904, 7
      %v907 = vshll.u32 %v881, 16
      %v909 = vor.u32 %v906, %v907
      %v911 = vshrl.u32 %v888, 16
      %v913 = vrot.slane %v911, 7
      %v914 = vshll.u32 %v888, 16
      %v916 = vor.u32 %v913, %v914
      %v918 = vshrl.u32 %v895, 16
      %v920 = vrot.slane %v918, 7
      %v921 = vshll.u32 %v895, 16
      %v923 = vor.u32 %v920, %v921
      %s928 = scalar_lea.vmem [#allocation2], 64
      %v929 = vld [vmem:[%s928] sm:$0x7]
      %v930 = vsel %vm655, %v902, %v929
      %931 = vst [vmem:[%s928] sm:$0x7] %v930
      %v932 = vld [vmem:[%s928 + $0x4] sm:$0x7]
      %v933 = vsel %vm655, %v909, %v932
      %934 = vst [vmem:[%s928 + $0x4] sm:$0x7] %v933
      %v935 = vld [vmem:[%s928 + $0x8] sm:$0x7]
      %v936 = vsel %vm655, %v916, %v935
      %937 = vst [vmem:[%s928 + $0x8] sm:$0x7] %v936
      %v938 = vld [vmem:[%s928 + $0xc] sm:$0x7]
      %v939 = vsel %vm655, %v923, %v938
      %940 = vst [vmem:[%s928 + $0xc] sm:$0x7] %v939
      %s941 = scalar_lea.vmem [#allocation2], 60
      %v942 = vld [vmem:[%s941] sm:$0x3]
      %v943 = vld [vmem:[%s941 + $0x4] sm:$0x3]
      %v944 = vld [vmem:[%s941 + $0x8] sm:$0x3]
      %v945 = vld [vmem:[%s941 + $0xc] sm:$0x3]
      %v946 = vld [vmem:[%s3] sm:$0xf]
      %v947 = vld [vmem:[%s3 + $0x4] sm:$0xf]
      %v948 = vld [vmem:[%s3 + $0x8] sm:$0xf]
      %v949 = vld [vmem:[%s3 + $0xc] sm:$0xf]
      %v950 = vld [vmem:[%s3 + $0x10] sm:$0xf]
      %v951 = vld [vmem:[%s3 + $0x14] sm:$0xf]
      %v952 = vld [vmem:[%s3 + $0x18] sm:$0xf]
      %v953 = vld [vmem:[%s3 + $0x1c] sm:$0xf]
      %v954 = vld [vmem:[%s3 + $0x20] sm:$0xf]
      %v955 = vld [vmem:[%s3 + $0x24] sm:$0xf]
      %v956 = vld [vmem:[%s3 + $0x28] sm:$0xf]
      %v957 = vld [vmem:[%s3 + $0x2c] sm:$0xf]
      %v958 = vld [vmem:[%s3 + $0x30] sm:$0xf]
      %v959 = vld [vmem:[%s3 + $0x34] sm:$0xf]
      %v960 = vld [vmem:[%s3 + $0x38] sm:$0xf]
      %v961 = vld [vmem:[%s3 + $0x3c] sm:$0xf]
      %s962 = scalar_lea.vmem [#allocation2], 40
      %v963 = vld [vmem:[%s962] sm:$0x7]
      %v964 = vld [vmem:[%s962 + $0x4] sm:$0x7]
      %v965 = vld [vmem:[%s962 + $0x8] sm:$0x7]
      %v966 = vld [vmem:[%s962 + $0xc] sm:$0x7]
      %v972 = vunpack.c.l.s4 1983009808
      %v973 = vunpack.c.0.s8 %v972
      %v974 = vlaneseq
      %v975 = vshrl.u32 %v974, 7
      %v976 = vsub.s32 %v973, %v975
      %v977 = vrot.slane %v963, %v976
      %v978 = vcombine.high %v977, %v977
      %v980 = vunpack.c.l.s4 1983009808
      %v981 = vunpack.c.0.s8 %v980
      %v982 = vlaneseq
      %v983 = vshrl.u32 %v982, 7
      %v984 = vsub.s32 %v981, %v983
      %v985 = vrot.slane %v964, %v984
      %v986 = vcombine.high %v985, %v985
      %v988 = vunpack.c.l.s4 1983009808
      %v989 = vunpack.c.0.s8 %v988
      %v990 = vlaneseq
      %v991 = vshrl.u32 %v990, 7
      %v992 = vsub.s32 %v989, %v991
      %v993 = vrot.slane %v965, %v992
      %v994 = vcombine.high %v993, %v993
      %v996 = vunpack.c.l.s4 1983009808
      %v997 = vunpack.c.0.s8 %v996
      %v998 = vlaneseq
      %v999 = vshrl.u32 %v998, 7
      %v1000 = vsub.s32 %v997, %v999
      %v1001 = vrot.slane %v966, %v1000
      %v1002 = vcombine.high %v1001, %v1001
      %vm1003 = vsmask.f32 1280
      %vm1004 = vsmask.f32 3336
      %vm1005 = vmor %vm1003, %vm1004
      %vm1006 = vsmask.f32 5392
      %vm1007 = vmor %vm1005, %vm1006
      %vm1008 = vsmask.f32 7448
      %vm1009 = vmor %vm1007, %vm1008
      %v1011 = vshrl.u32 %v977, 16
      %v1013 = vrot.slane %v1011, 6
      %v1014 = vshll.u32 %v977, 16
      %v1016 = vrot.slane %v1014, 7
      %v1017 = vor.u32 %v1013, %v1016
      %v1018 = vrot.slane %v1017, 2
      %v1020 = vshll.u32 %v978, 16
      %v1022 = vrot.slane %v1020, 7
      %v1023 = vsel %vm1009, %v1018, %v1022
      %v1025 = vshrl.u32 %v985, 16
      %v1027 = vrot.slane %v1025, 6
      %v1028 = vshll.u32 %v985, 16
      %v1030 = vrot.slane %v1028, 7
      %v1031 = vor.u32 %v1027, %v1030
      %v1032 = vrot.slane %v1031, 2
      %v1034 = vshll.u32 %v986, 16
      %v1036 = vrot.slane %v1034, 7
      %v1037 = vsel %vm1009, %v1032, %v1036
      %v1039 = vshrl.u32 %v993, 16
      %v1041 = vrot.slane %v1039, 6
      %v1042 = vshll.u32 %v993, 16
      %v1044 = vrot.slane %v1042, 7
      %v1045 = vor.u32 %v1041, %v1044
      %v1046 = vrot.slane %v1045, 2
      %v1048 = vshll.u32 %v994, 16
      %v1050 = vrot.slane %v1048, 7
      %v1051 = vsel %vm1009, %v1046, %v1050
      %v1053 = vshrl.u32 %v1001, 16
      %v1055 = vrot.slane %v1053, 6
      %v1056 = vshll.u32 %v1001, 16
      %v1058 = vrot.slane %v1056, 7
      %v1059 = vor.u32 %v1055, %v1058
      %v1060 = vrot.slane %v1059, 2
      %v1062 = vshll.u32 %v1002, 16
      %v1064 = vrot.slane %v1062, 7
      %v1065 = vsel %vm1009, %v1060, %v1064
      %s1066 = scalar_lea.vmem %s3, 64
      %v1067 = vld [vmem:[%s1066] sm:$0xf]
      %v1068 = vld [vmem:[%s1066 + $0x4] sm:$0xf]
      %v1069 = vld [vmem:[%s1066 + $0x8] sm:$0xf]
      %v1070 = vld [vmem:[%s1066 + $0xc] sm:$0xf]
      %v1071 = vld [vmem:[%s1066 + $0x10] sm:$0xf]
      %v1072 = vld [vmem:[%s1066 + $0x14] sm:$0xf]
      %v1073 = vld [vmem:[%s1066 + $0x18] sm:$0xf]
      %v1074 = vld [vmem:[%s1066 + $0x1c] sm:$0xf]
      %v1075 = vld [vmem:[%s1066 + $0x20] sm:$0xf]
      %v1076 = vld [vmem:[%s1066 + $0x24] sm:$0xf]
      %v1077 = vld [vmem:[%s1066 + $0x28] sm:$0xf]
      %v1078 = vld [vmem:[%s1066 + $0x2c] sm:$0xf]
      %v1079 = vld [vmem:[%s1066 + $0x30] sm:$0xf]
      %v1080 = vld [vmem:[%s1066 + $0x34] sm:$0xf]
      %v1081 = vld [vmem:[%s1066 + $0x38] sm:$0xf]
      %v1082 = vld [vmem:[%s1066 + $0x3c] sm:$0xf]
      %v1083 = vcombine.low %v1023, %v1037
      %v1084 = vcombine.low %v1051, %v1065
      %v1086 = vunpack.c.l.s4 1983009808
      %v1087 = vunpack.c.0.s8 %v1086
      %v1088 = vlaneseq
      %v1089 = vshrl.u32 %v1088, 7
      %v1090 = vsub.s32 %v1087, %v1089
      %v1091 = vrot.slane %v1083, %v1090
      %v1093 = vunpack.c.l.s4 1983009808
      %v1094 = vunpack.c.0.s8 %v1093
      %v1095 = vlaneseq
      %v1096 = vshrl.u32 %v1095, 7
      %v1097 = vsub.s32 %v1094, %v1096
      %v1098 = vrot.slane %v1084, %v1097
      %v1099 = vcombine.low %v1091, %v1098
      %v1117 = vunpack.c.l.b16 %v1067
      %v1118 = vunpack.c.l.b16 %v1068
      %v1119 = vunpack.c.l.b16 %v1069
      %v1120 = vunpack.c.l.b16 %v1070
      %v1121 = vunpack.c.l.b16 %v1071
      %v1122 = vunpack.c.l.b16 %v1072
      %v1123 = vunpack.c.l.b16 %v1073
      %v1124 = vunpack.c.l.b16 %v1074
      %v1125 = vunpack.c.l.b16 %v1075
      %v1126 = vunpack.c.l.b16 %v1076
      %v1127 = vunpack.c.l.b16 %v1077
      %v1128 = vunpack.c.l.b16 %v1078
      %v1129 = vunpack.c.l.b16 %v1079
      %v1130 = vunpack.c.l.b16 %v1080
      %v1131 = vunpack.c.l.b16 %v1081
      %v1132 = vunpack.c.l.b16 %v1082
      %v1133 = vpack.c.b16 %v1118, %v1117
      %v1134 = vpack.c.b16 %v1120, %v1119
      %v1135 = vpack.c.b16 %v1122, %v1121
      %v1136 = vpack.c.b16 %v1124, %v1123
      %v1137 = vpack.c.b16 %v1126, %v1125
      %v1138 = vpack.c.b16 %v1128, %v1127
      %v1139 = vpack.c.b16 %v1130, %v1129
      %v1140 = vpack.c.b16 %v1132, %v1131
      %1149 = vmatprep.subr.bf16.mxu0 0
      %1150 = vmatpush1.bf16.msra.mxu0 %v1133
      %1151 = vmatprep.subr.bf16.mxu0 0
      %1152 = vmatpush1.bf16.msra.mxu0 %v1134
      %1153 = vmatprep.subr.bf16.mxu0 0
      %1154 = vmatpush1.bf16.msra.mxu0 %v1135
      %1155 = vmatprep.subr.bf16.mxu0 0
      %1156 = vmatpush1.bf16.msra.mxu0 %v1136
      %1157 = vmatprep.subr.bf16.mxu0 0
      %1158 = vmatpush1.bf16.msra.mxu0 %v1137
      %1159 = vmatprep.subr.bf16.mxu0 0
      %1160 = vmatpush1.bf16.msra.mxu0 %v1138
      %1161 = vmatprep.subr.bf16.mxu0 0
      %1162 = vmatpush1.bf16.msra.mxu0 %v1139
      %1163 = vmatprep.subr.bf16.mxu0 0
      %1164 = vmatpush1.bf16.msra.mxu0 %v1140
      %1165 = vmatprep.subr.bf16.mxu0 0
      %1166 = vmatpush1.bf16.msra.mxu0 0
      %1167 = vmatprep.subr.bf16.mxu0 0
      %1168 = vmatpush1.bf16.msra.mxu0 0
      %1169 = vmatprep.subr.bf16.mxu0 0
      %1170 = vmatpush1.bf16.msra.mxu0 0
      %1171 = vmatprep.subr.bf16.mxu0 0
      %1172 = vmatpush1.bf16.msra.mxu0 0
      %1173 = vmatprep.subr.bf16.mxu0 0
      %1174 = vmatpush1.bf16.msra.mxu0 0
      %1175 = vmatprep.subr.bf16.mxu0 0
      %1176 = vmatpush1.bf16.msra.mxu0 0
      %1177 = vmatprep.subr.bf16.mxu0 0
      %1178 = vmatpush1.bf16.msra.mxu0 0
      %1179 = vmatprep.subr.bf16.mxu0 0
      %1180 = vmatpush1.bf16.msra.mxu0 0
      %1181 = vmatprep.mubr.bf16.mxu0 0
      %1182 = vmatmul.mubr.bf16.gmra.mrb[0].mxu0 %v1099
      %v1183 = vpop.f32.mrb[0].mxu0
      %v1184 = vadd.f32 0.0, %v1183
      %v1185 = vpop.f32.mrb[0].mxu0
      %v1186 = vpop.f32.mrb[0].mxu0
      %v1187 = vadd.f32 0.0, %v1186
      %v1188 = vpop.f32.mrb[0].mxu0
      %1189 = vdwg.mxu0
      %v1194 = vcombine.low %v942, %v943
      %v1195 = vcombine.low %v944, %v945
      %v1197 = vunpack.c.l.s4 1983009808
      %v1198 = vunpack.c.0.s8 %v1197
      %v1199 = vlaneseq
      %v1200 = vshrl.u32 %v1199, 7
      %v1201 = vsub.s32 %v1198, %v1200
      %v1202 = vrot.slane %v1194, %v1201
      %v1204 = vunpack.c.l.s4 1983009808
      %v1205 = vunpack.c.0.s8 %v1204
      %v1206 = vlaneseq
      %v1207 = vshrl.u32 %v1206, 7
      %v1208 = vsub.s32 %v1205, %v1207
      %v1209 = vrot.slane %v1195, %v1208
      %v1210 = vcombine.low %v1202, %v1209
      %v1228 = vunpack.c.l.b16 %v946
      %v1229 = vunpack.c.l.b16 %v947
      %v1230 = vunpack.c.l.b16 %v948
      %v1231 = vunpack.c.l.b16 %v949
      %v1232 = vunpack.c.l.b16 %v950
      %v1233 = vunpack.c.l.b16 %v951
      %v1234 = vunpack.c.l.b16 %v952
      %v1235 = vunpack.c.l.b16 %v953
      %v1236 = vunpack.c.l.b16 %v954
      %v1237 = vunpack.c.l.b16 %v955
      %v1238 = vunpack.c.l.b16 %v956
      %v1239 = vunpack.c.l.b16 %v957
      %v1240 = vunpack.c.l.b16 %v958
      %v1241 = vunpack.c.l.b16 %v959
      %v1242 = vunpack.c.l.b16 %v960
      %v1243 = vunpack.c.l.b16 %v961
      %v1244 = vpack.c.b16 %v1229, %v1228
      %v1245 = vpack.c.b16 %v1231, %v1230
      %v1246 = vpack.c.b16 %v1233, %v1232
      %v1247 = vpack.c.b16 %v1235, %v1234
      %v1248 = vpack.c.b16 %v1237, %v1236
      %v1249 = vpack.c.b16 %v1239, %v1238
      %v1250 = vpack.c.b16 %v1241, %v1240
      %v1251 = vpack.c.b16 %v1243, %v1242
      %1260 = vmatprep.subr.bf16.mxu0 0
      %1261 = vmatpush1.bf16.msra.mxu0 %v1244
      %1262 = vmatprep.subr.bf16.mxu0 0
      %1263 = vmatpush1.bf16.msra.mxu0 %v1245
      %1264 = vmatprep.subr.bf16.mxu0 0
      %1265 = vmatpush1.bf16.msra.mxu0 %v1246
      %1266 = vmatprep.subr.bf16.mxu0 0
      %1267 = vmatpush1.bf16.msra.mxu0 %v1247
      %1268 = vmatprep.subr.bf16.mxu0 0
      %1269 = vmatpush1.bf16.msra.mxu0 %v1248
      %1270 = vmatprep.subr.bf16.mxu0 0
      %1271 = vmatpush1.bf16.msra.mxu0 %v1249
      %1272 = vmatprep.subr.bf16.mxu0 0
      %1273 = vmatpush1.bf16.msra.mxu0 %v1250
      %1274 = vmatprep.subr.bf16.mxu0 0
      %1275 = vmatpush1.bf16.msra.mxu0 %v1251
      %1276 = vmatprep.subr.bf16.mxu0 0
      %1277 = vmatpush1.bf16.msra.mxu0 0
      %1278 = vmatprep.subr.bf16.mxu0 0
      %1279 = vmatpush1.bf16.msra.mxu0 0
      %1280 = vmatprep.subr.bf16.mxu0 0
      %1281 = vmatpush1.bf16.msra.mxu0 0
      %1282 = vmatprep.subr.bf16.mxu0 0
      %1283 = vmatpush1.bf16.msra.mxu0 0
      %1284 = vmatprep.subr.bf16.mxu0 0
      %1285 = vmatpush1.bf16.msra.mxu0 0
      %1286 = vmatprep.subr.bf16.mxu0 0
      %1287 = vmatpush1.bf16.msra.mxu0 0
      %1288 = vmatprep.subr.bf16.mxu0 0
      %1289 = vmatpush1.bf16.msra.mxu0 0
      %1290 = vmatprep.subr.bf16.mxu0 0
      %1291 = vmatpush1.bf16.msra.mxu0 0
      %1292 = vmatprep.mubr.bf16.mxu0 0
      %1293 = vmatmul.mubr.bf16.gmra.mrb[0].mxu0 %v1210
      %v1294 = vpop.f32.mrb[0].mxu0
      %v1295 = vadd.f32 %v1184, %v1294
      %v1296 = vpop.f32.mrb[0].mxu0
      %v1297 = vpop.f32.mrb[0].mxu0
      %v1298 = vadd.f32 %v1187, %v1297
      %v1299 = vpop.f32.mrb[0].mxu0
      %1300 = vdwg.mxu0
      %v1301 = vld [vmem:[%s941] sm:$0x7]
      %v1302 = vld [vmem:[%s941 + $0x4] sm:$0x7]
      %v1303 = vld [vmem:[%s941 + $0x8] sm:$0x7]
      %v1304 = vld [vmem:[%s941 + $0xc] sm:$0x7]
      %v1310 = vunpack.c.l.s4 1983009808
      %v1311 = vunpack.c.0.s8 %v1310
      %v1312 = vlaneseq
      %v1313 = vshrl.u32 %v1312, 7
      %v1314 = vsub.s32 %v1311, %v1313
      %v1315 = vrot.slane %v1301, %v1314
      %v1316 = vcombine.high %v1315, %v1315
      %v1318 = vunpack.c.l.s4 1983009808
      %v1319 = vunpack.c.0.s8 %v1318
      %v1320 = vlaneseq
      %v1321 = vshrl.u32 %v1320, 7
      %v1322 = vsub.s32 %v1319, %v1321
      %v1323 = vrot.slane %v1302, %v1322
      %v1324 = vcombine.high %v1323, %v1323
      %v1326 = vunpack.c.l.s4 1983009808
      %v1327 = vunpack.c.0.s8 %v1326
      %v1328 = vlaneseq
      %v1329 = vshrl.u32 %v1328, 7
      %v1330 = vsub.s32 %v1327, %v1329
      %v1331 = vrot.slane %v1303, %v1330
      %v1332 = vcombine.high %v1331, %v1331
      %v1334 = vunpack.c.l.s4 1983009808
      %v1335 = vunpack.c.0.s8 %v1334
      %v1336 = vlaneseq
      %v1337 = vshrl.u32 %v1336, 7
      %v1338 = vsub.s32 %v1335, %v1337
      %v1339 = vrot.slane %v1304, %v1338
      %v1340 = vcombine.high %v1339, %v1339
      %v1342 = vshrl.u32 %v1315, 16
      %v1344 = vrot.slane %v1342, 6
      %v1345 = vshll.u32 %v1315, 16
      %v1347 = vrot.slane %v1345, 7
      %v1348 = vor.u32 %v1344, %v1347
      %v1349 = vrot.slane %v1348, 2
      %v1351 = vshll.u32 %v1316, 16
      %v1353 = vrot.slane %v1351, 7
      %v1354 = vsel %vm1009, %v1349, %v1353
      %v1356 = vshrl.u32 %v1323, 16
      %v1358 = vrot.slane %v1356, 6
      %v1359 = vshll.u32 %v1323, 16
      %v1361 = vrot.slane %v1359, 7
      %v1362 = vor.u32 %v1358, %v1361
      %v1363 = vrot.slane %v1362, 2
      %v1365 = vshll.u32 %v1324, 16
      %v1367 = vrot.slane %v1365, 7
      %v1368 = vsel %vm1009, %v1363, %v1367
      %v1370 = vshrl.u32 %v1331, 16
      %v1372 = vrot.slane %v1370, 6
      %v1373 = vshll.u32 %v1331, 16
      %v1375 = vrot.slane %v1373, 7
      %v1376 = vor.u32 %v1372, %v1375
      %v1377 = vrot.slane %v1376, 2
      %v1379 = vshll.u32 %v1332, 16
      %v1381 = vrot.slane %v1379, 7
      %v1382 = vsel %vm1009, %v1377, %v1381
      %v1384 = vshrl.u32 %v1339, 16
      %v1386 = vrot.slane %v1384, 6
      %v1387 = vshll.u32 %v1339, 16
      %v1389 = vrot.slane %v1387, 7
      %v1390 = vor.u32 %v1386, %v1389
      %v1391 = vrot.slane %v1390, 2
      %v1393 = vshll.u32 %v1340, 16
      %v1395 = vrot.slane %v1393, 7
      %v1396 = vsel %vm1009, %v1391, %v1395
      %s1397 = scalar_lea.vmem %s3, 128
      %v1398 = vld [vmem:[%s1397] sm:$0xf]
      %v1399 = vld [vmem:[%s1397 + $0x4] sm:$0xf]
      %v1400 = vld [vmem:[%s1397 + $0x8] sm:$0xf]
      %v1401 = vld [vmem:[%s1397 + $0xc] sm:$0xf]
      %v1402 = vld [vmem:[%s1397 + $0x10] sm:$0xf]
      %v1403 = vld [vmem:[%s1397 + $0x14] sm:$0xf]
      %v1404 = vld [vmem:[%s1397 + $0x18] sm:$0xf]
      %v1405 = vld [vmem:[%s1397 + $0x1c] sm:$0xf]
      %v1406 = vld [vmem:[%s1397 + $0x20] sm:$0xf]
      %v1407 = vld [vmem:[%s1397 + $0x24] sm:$0xf]
      %v1408 = vld [vmem:[%s1397 + $0x28] sm:$0xf]
      %v1409 = vld [vmem:[%s1397 + $0x2c] sm:$0xf]
      %v1410 = vld [vmem:[%s1397 + $0x30] sm:$0xf]
      %v1411 = vld [vmem:[%s1397 + $0x34] sm:$0xf]
      %v1412 = vld [vmem:[%s1397 + $0x38] sm:$0xf]
      %v1413 = vld [vmem:[%s1397 + $0x3c] sm:$0xf]
      %v1414 = vcombine.low %v1354, %v1368
      %v1415 = vcombine.low %v1382, %v1396
      %v1417 = vunpack.c.l.s4 1983009808
      %v1418 = vunpack.c.0.s8 %v1417
      %v1419 = vlaneseq
      %v1420 = vshrl.u32 %v1419, 7
      %v1421 = vsub.s32 %v1418, %v1420
      %v1422 = vrot.slane %v1414, %v1421
      %v1424 = vunpack.c.l.s4 1983009808
      %v1425 = vunpack.c.0.s8 %v1424
      %v1426 = vlaneseq
      %v1427 = vshrl.u32 %v1426, 7
      %v1428 = vsub.s32 %v1425, %v1427
      %v1429 = vrot.slane %v1415, %v1428
      %v1430 = vcombine.low %v1422, %v1429
      %v1448 = vunpack.c.l.b16 %v1398
      %v1449 = vunpack.c.l.b16 %v1399
      %v1450 = vunpack.c.l.b16 %v1400
      %v1451 = vunpack.c.l.b16 %v1401
      %v1452 = vunpack.c.l.b16 %v1402
      %v1453 = vunpack.c.l.b16 %v1403
      %v1454 = vunpack.c.l.b16 %v1404
      %v1455 = vunpack.c.l.b16 %v1405
      %v1456 = vunpack.c.l.b16 %v1406
      %v1457 = vunpack.c.l.b16 %v1407
      %v1458 = vunpack.c.l.b16 %v1408
      %v1459 = vunpack.c.l.b16 %v1409
      %v1460 = vunpack.c.l.b16 %v1410
      %v1461 = vunpack.c.l.b16 %v1411
      %v1462 = vunpack.c.l.b16 %v1412
      %v1463 = vunpack.c.l.b16 %v1413
      %v1464 = vpack.c.b16 %v1449, %v1448
      %v1465 = vpack.c.b16 %v1451, %v1450
      %v1466 = vpack.c.b16 %v1453, %v1452
      %v1467 = vpack.c.b16 %v1455, %v1454
      %v1468 = vpack.c.b16 %v1457, %v1456
      %v1469 = vpack.c.b16 %v1459, %v1458
      %v1470 = vpack.c.b16 %v1461, %v1460
      %v1471 = vpack.c.b16 %v1463, %v1462
      %1480 = vmatprep.subr.bf16.mxu0 0
      %1481 = vmatpush1.bf16.msra.mxu0 %v1464
      %1482 = vmatprep.subr.bf16.mxu0 0
      %1483 = vmatpush1.bf16.msra.mxu0 %v1465
      %1484 = vmatprep.subr.bf16.mxu0 0
      %1485 = vmatpush1.bf16.msra.mxu0 %v1466
      %1486 = vmatprep.subr.bf16.mxu0 0
      %1487 = vmatpush1.bf16.msra.mxu0 %v1467
      %1488 = vmatprep.subr.bf16.mxu0 0
      %1489 = vmatpush1.bf16.msra.mxu0 %v1468
      %1490 = vmatprep.subr.bf16.mxu0 0
      %1491 = vmatpush1.bf16.msra.mxu0 %v1469
      %1492 = vmatprep.subr.bf16.mxu0 0
      %1493 = vmatpush1.bf16.msra.mxu0 %v1470
      %1494 = vmatprep.subr.bf16.mxu0 0
      %1495 = vmatpush1.bf16.msra.mxu0 %v1471
      %1496 = vmatprep.subr.bf16.mxu0 0
      %1497 = vmatpush1.bf16.msra.mxu0 0
      %1498 = vmatprep.subr.bf16.mxu0 0
      %1499 = vmatpush1.bf16.msra.mxu0 0
      %1500 = vmatprep.subr.bf16.mxu0 0
      %1501 = vmatpush1.bf16.msra.mxu0 0
      %1502 = vmatprep.subr.bf16.mxu0 0
      %1503 = vmatpush1.bf16.msra.mxu0 0
      %1504 = vmatprep.subr.bf16.mxu0 0
      %1505 = vmatpush1.bf16.msra.mxu0 0
      %1506 = vmatprep.subr.bf16.mxu0 0
      %1507 = vmatpush1.bf16.msra.mxu0 0
      %1508 = vmatprep.subr.bf16.mxu0 0
      %1509 = vmatpush1.bf16.msra.mxu0 0
      %1510 = vmatprep.subr.bf16.mxu0 0
      %1511 = vmatpush1.bf16.msra.mxu0 0
      %1512 = vmatprep.mubr.bf16.mxu0 0
      %1513 = vmatmul.mubr.bf16.gmra.mrb[0].mxu0 %v1430
      %v1514 = vpop.f32.mrb[0].mxu0
      %v1515 = vadd.f32 0.0, %v1514
      %v1516 = vpop.f32.mrb[0].mxu0
      %v1517 = vpop.f32.mrb[0].mxu0
      %v1518 = vadd.f32 0.0, %v1517
      %v1519 = vpop.f32.mrb[0].mxu0
      %1520 = vdwg.mxu0
      %v1521 = vadd.f32 %v1295, %v1515
      %v1522 = vadd.f32 %v1298, %v1518
      %v1523 = vld [vmem:[%s746] sm:$0x3]
      %v1524 = vld [vmem:[%s746 + $0x4] sm:$0x3]
      %v1525 = vld [vmem:[%s746 + $0x8] sm:$0x3]
      %v1526 = vld [vmem:[%s746 + $0xc] sm:$0x3]
      %s1527 = scalar_lea.vmem %s3, 192
      %v1528 = vld [vmem:[%s1527] sm:$0xf]
      %v1529 = vld [vmem:[%s1527 + $0x4] sm:$0xf]
      %v1530 = vld [vmem:[%s1527 + $0x8] sm:$0xf]
      %v1531 = vld [vmem:[%s1527 + $0xc] sm:$0xf]
      %v1532 = vld [vmem:[%s1527 + $0x10] sm:$0xf]
      %v1533 = vld [vmem:[%s1527 + $0x14] sm:$0xf]
      %v1534 = vld [vmem:[%s1527 + $0x18] sm:$0xf]
      %v1535 = vld [vmem:[%s1527 + $0x1c] sm:$0xf]
      %v1536 = vld [vmem:[%s1527 + $0x20] sm:$0xf]
      %v1537 = vld [vmem:[%s1527 + $0x24] sm:$0xf]
      %v1538 = vld [vmem:[%s1527 + $0x28] sm:$0xf]
      %v1539 = vld [vmem:[%s1527 + $0x2c] sm:$0xf]
      %v1540 = vld [vmem:[%s1527 + $0x30] sm:$0xf]
      %v1541 = vld [vmem:[%s1527 + $0x34] sm:$0xf]
      %v1542 = vld [vmem:[%s1527 + $0x38] sm:$0xf]
      %v1543 = vld [vmem:[%s1527 + $0x3c] sm:$0xf]
      %v1548 = vcombine.low %v1523, %v1524
      %v1549 = vcombine.low %v1525, %v1526
      %v1551 = vunpack.c.l.s4 1983009808
      %v1552 = vunpack.c.0.s8 %v1551
      %v1553 = vlaneseq
      %v1554 = vshrl.u32 %v1553, 7
      %v1555 = vsub.s32 %v1552, %v1554
      %v1556 = vrot.slane %v1548, %v1555
      %v1558 = vunpack.c.l.s4 1983009808
      %v1559 = vunpack.c.0.s8 %v1558
      %v1560 = vlaneseq
      %v1561 = vshrl.u32 %v1560, 7
      %v1562 = vsub.s32 %v1559, %v1561
      %v1563 = vrot.slane %v1549, %v1562
      %v1564 = vcombine.low %v1556, %v1563
      %v1582 = vunpack.c.l.b16 %v1528
      %v1583 = vunpack.c.l.b16 %v1529
      %v1584 = vunpack.c.l.b16 %v1530
      %v1585 = vunpack.c.l.b16 %v1531
      %v1586 = vunpack.c.l.b16 %v1532
      %v1587 = vunpack.c.l.b16 %v1533
      %v1588 = vunpack.c.l.b16 %v1534
      %v1589 = vunpack.c.l.b16 %v1535
      %v1590 = vunpack.c.l.b16 %v1536
      %v1591 = vunpack.c.l.b16 %v1537
      %v1592 = vunpack.c.l.b16 %v1538
      %v1593 = vunpack.c.l.b16 %v1539
      %v1594 = vunpack.c.l.b16 %v1540
      %v1595 = vunpack.c.l.b16 %v1541
      %v1596 = vunpack.c.l.b16 %v1542
      %v1597 = vunpack.c.l.b16 %v1543
      %v1598 = vpack.c.b16 %v1583, %v1582
      %v1599 = vpack.c.b16 %v1585, %v1584
      %v1600 = vpack.c.b16 %v1587, %v1586
      %v1601 = vpack.c.b16 %v1589, %v1588
      %v1602 = vpack.c.b16 %v1591, %v1590
      %v1603 = vpack.c.b16 %v1593, %v1592
      %v1604 = vpack.c.b16 %v1595, %v1594
      %v1605 = vpack.c.b16 %v1597, %v1596
      %1614 = vmatprep.subr.bf16.mxu0 0
      %1615 = vmatpush1.bf16.msra.mxu0 %v1598
      %1616 = vmatprep.subr.bf16.mxu0 0
      %1617 = vmatpush1.bf16.msra.mxu0 %v1599
      %1618 = vmatprep.subr.bf16.mxu0 0
      %1619 = vmatpush1.bf16.msra.mxu0 %v1600
      %1620 = vmatprep.subr.bf16.mxu0 0
      %1621 = vmatpush1.bf16.msra.mxu0 %v1601
      %1622 = vmatprep.subr.bf16.mxu0 0
      %1623 = vmatpush1.bf16.msra.mxu0 %v1602
      %1624 = vmatprep.subr.bf16.mxu0 0
      %1625 = vmatpush1.bf16.msra.mxu0 %v1603
      %1626 = vmatprep.subr.bf16.mxu0 0
      %1627 = vmatpush1.bf16.msra.mxu0 %v1604
      %1628 = vmatprep.subr.bf16.mxu0 0
      %1629 = vmatpush1.bf16.msra.mxu0 %v1605
      %1630 = vmatprep.subr.bf16.mxu0 0
      %1631 = vmatpush1.bf16.msra.mxu0 0
      %1632 = vmatprep.subr.bf16.mxu0 0
      %1633 = vmatpush1.bf16.msra.mxu0 0
      %1634 = vmatprep.subr.bf16.mxu0 0
      %1635 = vmatpush1.bf16.msra.mxu0 0
      %1636 = vmatprep.subr.bf16.mxu0 0
      %1637 = vmatpush1.bf16.msra.mxu0 0
      %1638 = vmatprep.subr.bf16.mxu0 0
      %1639 = vmatpush1.bf16.msra.mxu0 0
      %1640 = vmatprep.subr.bf16.mxu0 0
      %1641 = vmatpush1.bf16.msra.mxu0 0
      %1642 = vmatprep.subr.bf16.mxu0 0
      %1643 = vmatpush1.bf16.msra.mxu0 0
      %1644 = vmatprep.subr.bf16.mxu0 0
      %1645 = vmatpush1.bf16.msra.mxu0 0
      %1646 = vmatprep.mubr.bf16.mxu0 0
      %1647 = vmatmul.mubr.bf16.gmra.mrb[0].mxu0 %v1564
      %v1648 = vpop.f32.mrb[0].mxu0
      %v1649 = vadd.f32 0.0, %v1648
      %v1650 = vpop.f32.mrb[0].mxu0
      %v1651 = vpop.f32.mrb[0].mxu0
      %v1652 = vadd.f32 0.0, %v1651
      %v1653 = vpop.f32.mrb[0].mxu0
      %1654 = vdwg.mxu0
      %v1655 = vadd.f32 %v1521, %v1649
      %v1656 = vadd.f32 %v1522, %v1652
      %v1657 = vld [vmem:[%s653] sm:$0x7]
      %v1658 = vld [vmem:[%s653 + $0x4] sm:$0x7]
      %v1659 = vld [vmem:[%s653 + $0x8] sm:$0x7]
      %v1660 = vld [vmem:[%s653 + $0xc] sm:$0x7]
      %v1666 = vunpack.c.l.s4 1983009808
      %v1667 = vunpack.c.0.s8 %v1666
      %v1668 = vlaneseq
      %v1669 = vshrl.u32 %v1668, 7
      %v1670 = vsub.s32 %v1667, %v1669
      %v1671 = vrot.slane %v1657, %v1670
      %v1672 = vcombine.high %v1671, %v1671
      %v1674 = vunpack.c.l.s4 1983009808
      %v1675 = vunpack.c.0.s8 %v1674
      %v1676 = vlaneseq
      %v1677 = vshrl.u32 %v1676, 7
      %v1678 = vsub.s32 %v1675, %v1677
      %v1679 = vrot.slane %v1658, %v1678
      %v1680 = vcombine.high %v1679, %v1679
      %v1682 = vunpack.c.l.s4 1983009808
      %v1683 = vunpack.c.0.s8 %v1682
      %v1684 = vlaneseq
      %v1685 = vshrl.u32 %v1684, 7
      %v1686 = vsub.s32 %v1683, %v1685
      %v1687 = vrot.slane %v1659, %v1686
      %v1688 = vcombine.high %v1687, %v1687
      %v1690 = vunpack.c.l.s4 1983009808
      %v1691 = vunpack.c.0.s8 %v1690
      %v1692 = vlaneseq
      %v1693 = vshrl.u32 %v1692, 7
      %v1694 = vsub.s32 %v1691, %v1693
      %v1695 = vrot.slane %v1660, %v1694
      %v1696 = vcombine.high %v1695, %v1695
      %v1698 = vshrl.u32 %v1671, 16
      %v1700 = vrot.slane %v1698, 6
      %v1701 = vshll.u32 %v1671, 16
      %v1703 = vrot.slane %v1701, 7
      %v1704 = vor.u32 %v1700, %v1703
      %v1705 = vrot.slane %v1704, 2
      %v1707 = vshll.u32 %v1672, 16
      %v1709 = vrot.slane %v1707, 7
      %v1710 = vsel %vm1009, %v1705, %v1709
      %v1712 = vshrl.u32 %v1679, 16
      %v1714 = vrot.slane %v1712, 6
      %v1715 = vshll.u32 %v1679, 16
      %v1717 = vrot.slane %v1715, 7
      %v1718 = vor.u32 %v1714, %v1717
      %v1719 = vrot.slane %v1718, 2
      %v1721 = vshll.u32 %v1680, 16
      %v1723 = vrot.slane %v1721, 7
      %v1724 = vsel %vm1009, %v1719, %v1723
      %v1726 = vshrl.u32 %v1687, 16
      %v1728 = vrot.slane %v1726, 6
      %v1729 = vshll.u32 %v1687, 16
      %v1731 = vrot.slane %v1729, 7
      %v1732 = vor.u32 %v1728, %v1731
      %v1733 = vrot.slane %v1732, 2
      %v1735 = vshll.u32 %v1688, 16
      %v1737 = vrot.slane %v1735, 7
      %v1738 = vsel %vm1009, %v1733, %v1737
      %v1740 = vshrl.u32 %v1695, 16
      %v1742 = vrot.slane %v1740, 6
      %v1743 = vshll.u32 %v1695, 16
      %v1745 = vrot.slane %v1743, 7
      %v1746 = vor.u32 %v1742, %v1745
      %v1747 = vrot.slane %v1746, 2
      %v1749 = vshll.u32 %v1696, 16
      %v1751 = vrot.slane %v1749, 7
      %v1752 = vsel %vm1009, %v1747, %v1751
      %s1753 = scalar_lea.vmem %s3, 256
      %v1754 = vld [vmem:[%s1753] sm:$0xf]
      %v1755 = vld [vmem:[%s1753 + $0x4] sm:$0xf]
      %v1756 = vld [vmem:[%s1753 + $0x8] sm:$0xf]
      %v1757 = vld [vmem:[%s1753 + $0xc] sm:$0xf]
      %v1758 = vld [vmem:[%s1753 + $0x10] sm:$0xf]
      %v1759 = vld [vmem:[%s1753 + $0x14] sm:$0xf]
      %v1760 = vld [vmem:[%s1753 + $0x18] sm:$0xf]
      %v1761 = vld [vmem:[%s1753 + $0x1c] sm:$0xf]
      %v1762 = vld [vmem:[%s1753 + $0x20] sm:$0xf]
      %v1763 = vld [vmem:[%s1753 + $0x24] sm:$0xf]
      %v1764 = vld [vmem:[%s1753 + $0x28] sm:$0xf]
      %v1765 = vld [vmem:[%s1753 + $0x2c] sm:$0xf]
      %v1766 = vld [vmem:[%s1753 + $0x30] sm:$0xf]
      %v1767 = vld [vmem:[%s1753 + $0x34] sm:$0xf]
      %v1768 = vld [vmem:[%s1753 + $0x38] sm:$0xf]
      %v1769 = vld [vmem:[%s1753 + $0x3c] sm:$0xf]
      %v1770 = vcombine.low %v1710, %v1724
      %v1771 = vcombine.low %v1738, %v1752
      %v1773 = vunpack.c.l.s4 1983009808
      %v1774 = vunpack.c.0.s8 %v1773
      %v1775 = vlaneseq
      %v1776 = vshrl.u32 %v1775, 7
      %v1777 = vsub.s32 %v1774, %v1776
      %v1778 = vrot.slane %v1770, %v1777
      %v1780 = vunpack.c.l.s4 1983009808
      %v1781 = vunpack.c.0.s8 %v1780
      %v1782 = vlaneseq
      %v1783 = vshrl.u32 %v1782, 7
      %v1784 = vsub.s32 %v1781, %v1783
      %v1785 = vrot.slane %v1771, %v1784
      %v1786 = vcombine.low %v1778, %v1785
      %v1804 = vunpack.c.l.b16 %v1754
      %v1805 = vunpack.c.l.b16 %v1755
      %v1806 = vunpack.c.l.b16 %v1756
      %v1807 = vunpack.c.l.b16 %v1757
      %v1808 = vunpack.c.l.b16 %v1758
      %v1809 = vunpack.c.l.b16 %v1759
      %v1810 = vunpack.c.l.b16 %v1760
      %v1811 = vunpack.c.l.b16 %v1761
      %v1812 = vunpack.c.l.b16 %v1762
      %v1813 = vunpack.c.l.b16 %v1763
      %v1814 = vunpack.c.l.b16 %v1764
      %v1815 = vunpack.c.l.b16 %v1765
      %v1816 = vunpack.c.l.b16 %v1766
      %v1817 = vunpack.c.l.b16 %v1767
      %v1818 = vunpack.c.l.b16 %v1768
      %v1819 = vunpack.c.l.b16 %v1769
      %v1820 = vpack.c.b16 %v1805, %v1804
      %v1821 = vpack.c.b16 %v1807, %v1806
      %v1822 = vpack.c.b16 %v1809, %v1808
      %v1823 = vpack.c.b16 %v1811, %v1810
      %v1824 = vpack.c.b16 %v1813, %v1812
      %v1825 = vpack.c.b16 %v1815, %v1814
      %v1826 = vpack.c.b16 %v1817, %v1816
      %v1827 = vpack.c.b16 %v1819, %v1818
      %1836 = vmatprep.subr.bf16.mxu0 0
      %1837 = vmatpush1.bf16.msra.mxu0 %v1820
      %1838 = vmatprep.subr.bf16.mxu0 0
      %1839 = vmatpush1.bf16.msra.mxu0 %v1821
      %1840 = vmatprep.subr.bf16.mxu0 0
      %1841 = vmatpush1.bf16.msra.mxu0 %v1822
      %1842 = vmatprep.subr.bf16.mxu0 0
      %1843 = vmatpush1.bf16.msra.mxu0 %v1823
      %1844 = vmatprep.subr.bf16.mxu0 0
      %1845 = vmatpush1.bf16.msra.mxu0 %v1824
      %1846 = vmatprep.subr.bf16.mxu0 0
      %1847 = vmatpush1.bf16.msra.mxu0 %v1825
      %1848 = vmatprep.subr.bf16.mxu0 0
      %1849 = vmatpush1.bf16.msra.mxu0 %v1826
      %1850 = vmatprep.subr.bf16.mxu0 0
      %1851 = vmatpush1.bf16.msra.mxu0 %v1827
      %1852 = vmatprep.subr.bf16.mxu0 0
      %1853 = vmatpush1.bf16.msra.mxu0 0
      %1854 = vmatprep.subr.bf16.mxu0 0
      %1855 = vmatpush1.bf16.msra.mxu0 0
      %1856 = vmatprep.subr.bf16.mxu0 0
      %1857 = vmatpush1.bf16.msra.mxu0 0
      %1858 = vmatprep.subr.bf16.mxu0 0
      %1859 = vmatpush1.bf16.msra.mxu0 0
      %1860 = vmatprep.subr.bf16.mxu0 0
      %1861 = vmatpush1.bf16.msra.mxu0 0
      %1862 = vmatprep.subr.bf16.mxu0 0
      %1863 = vmatpush1.bf16.msra.mxu0 0
      %1864 = vmatprep.subr.bf16.mxu0 0
      %1865 = vmatpush1.bf16.msra.mxu0 0
      %1866 = vmatprep.subr.bf16.mxu0 0
      %1867 = vmatpush1.bf16.msra.mxu0 0
      %1868 = vmatprep.mubr.bf16.mxu0 0
      %1869 = vmatmul.mubr.bf16.gmra.mrb[0].mxu0 %v1786
      %v1870 = vpop.f32.mrb[0].mxu0
      %v1871 = vadd.f32 0.0, %v1870
      %v1872 = vpop.f32.mrb[0].mxu0
      %v1873 = vpop.f32.mrb[0].mxu0
      %v1874 = vadd.f32 0.0, %v1873
      %v1875 = vpop.f32.mrb[0].mxu0
      %1876 = vdwg.mxu0
      %v1877 = vadd.f32 %v1655, %v1871
      %v1878 = vadd.f32 %v1656, %v1874
      %v1879 = vld [vmem:[%s746] sm:$0x7]
      %v1880 = vld [vmem:[%s746 + $0x4] sm:$0x7]
      %v1881 = vld [vmem:[%s746 + $0x8] sm:$0x7]
      %v1882 = vld [vmem:[%s746 + $0xc] sm:$0x7]
      %v1888 = vunpack.c.l.s4 1983009808
      %v1889 = vunpack.c.0.s8 %v1888
      %v1890 = vlaneseq
      %v1891 = vshrl.u32 %v1890, 7
      %v1892 = vsub.s32 %v1889, %v1891
      %v1893 = vrot.slane %v1879, %v1892
      %v1894 = vcombine.high %v1893, %v1893
      %v1896 = vunpack.c.l.s4 1983009808
      %v1897 = vunpack.c.0.s8 %v1896
      %v1898 = vlaneseq
      %v1899 = vshrl.u32 %v1898, 7
      %v1900 = vsub.s32 %v1897, %v1899
      %v1901 = vrot.slane %v1880, %v1900
      %v1902 = vcombine.high %v1901, %v1901
      %v1904 = vunpack.c.l.s4 1983009808
      %v1905 = vunpack.c.0.s8 %v1904
      %v1906 = vlaneseq
      %v1907 = vshrl.u32 %v1906, 7
      %v1908 = vsub.s32 %v1905, %v1907
      %v1909 = vrot.slane %v1881, %v1908
      %v1910 = vcombine.high %v1909, %v1909
      %v1912 = vunpack.c.l.s4 1983009808
      %v1913 = vunpack.c.0.s8 %v1912
      %v1914 = vlaneseq
      %v1915 = vshrl.u32 %v1914, 7
      %v1916 = vsub.s32 %v1913, %v1915
      %v1917 = vrot.slane %v1882, %v1916
      %v1918 = vcombine.high %v1917, %v1917
      %v1920 = vshrl.u32 %v1893, 16
      %v1922 = vrot.slane %v1920, 6
      %v1923 = vshll.u32 %v1893, 16
      %v1925 = vrot.slane %v1923, 7
      %v1926 = vor.u32 %v1922, %v1925
      %v1927 = vrot.slane %v1926, 2
      %v1929 = vshll.u32 %v1894, 16
      %v1931 = vrot.slane %v1929, 7
      %v1932 = vsel %vm1009, %v1927, %v1931
      %v1934 = vshrl.u32 %v1901, 16
      %v1936 = vrot.slane %v1934, 6
      %v1937 = vshll.u32 %v1901, 16
      %v1939 = vrot.slane %v1937, 7
      %v1940 = vor.u32 %v1936, %v1939
      %v1941 = vrot.slane %v1940, 2
      %v1943 = vshll.u32 %v1902, 16
      %v1945 = vrot.slane %v1943, 7
      %v1946 = vsel %vm1009, %v1941, %v1945
      %v1948 = vshrl.u32 %v1909, 16
      %v1950 = vrot.slane %v1948, 6
      %v1951 = vshll.u32 %v1909, 16
      %v1953 = vrot.slane %v1951, 7
      %v1954 = vor.u32 %v1950, %v1953
      %v1955 = vrot.slane %v1954, 2
      %v1957 = vshll.u32 %v1910, 16
      %v1959 = vrot.slane %v1957, 7
      %v1960 = vsel %vm1009, %v1955, %v1959
      %v1962 = vshrl.u32 %v1917, 16
      %v1964 = vrot.slane %v1962, 6
      %v1965 = vshll.u32 %v1917, 16
      %v1967 = vrot.slane %v1965, 7
      %v1968 = vor.u32 %v1964, %v1967
      %v1969 = vrot.slane %v1968, 2
      %v1971 = vshll.u32 %v1918, 16
      %v1973 = vrot.slane %v1971, 7
      %v1974 = vsel %vm1009, %v1969, %v1973
      %s1975 = scalar_lea.vmem %s3, 320
      %v1976 = vld [vmem:[%s1975] sm:$0xf]
      %v1977 = vld [vmem:[%s1975 + $0x4] sm:$0xf]
      %v1978 = vld [vmem:[%s1975 + $0x8] sm:$0xf]
      %v1979 = vld [vmem:[%s1975 + $0xc] sm:$0xf]
      %v1980 = vld [vmem:[%s1975 + $0x10] sm:$0xf]
      %v1981 = vld [vmem:[%s1975 + $0x14] sm:$0xf]
      %v1982 = vld [vmem:[%s1975 + $0x18] sm:$0xf]
      %v1983 = vld [vmem:[%s1975 + $0x1c] sm:$0xf]
      %v1984 = vld [vmem:[%s1975 + $0x20] sm:$0xf]
      %v1985 = vld [vmem:[%s1975 + $0x24] sm:$0xf]
      %v1986 = vld [vmem:[%s1975 + $0x28] sm:$0xf]
      %v1987 = vld [vmem:[%s1975 + $0x2c] sm:$0xf]
      %v1988 = vld [vmem:[%s1975 + $0x30] sm:$0xf]
      %v1989 = vld [vmem:[%s1975 + $0x34] sm:$0xf]
      %v1990 = vld [vmem:[%s1975 + $0x38] sm:$0xf]
      %v1991 = vld [vmem:[%s1975 + $0x3c] sm:$0xf]
      %v1992 = vcombine.low %v1932, %v1946
      %v1993 = vcombine.low %v1960, %v1974
      %v1995 = vunpack.c.l.s4 1983009808
      %v1996 = vunpack.c.0.s8 %v1995
      %v1997 = vlaneseq
      %v1998 = vshrl.u32 %v1997, 7
      %v1999 = vsub.s32 %v1996, %v1998
      %v2000 = vrot.slane %v1992, %v1999
      %v2002 = vunpack.c.l.s4 1983009808
      %v2003 = vunpack.c.0.s8 %v2002
      %v2004 = vlaneseq
      %v2005 = vshrl.u32 %v2004, 7
      %v2006 = vsub.s32 %v2003, %v2005
      %v2007 = vrot.slane %v1993, %v2006
      %v2008 = vcombine.low %v2000, %v2007
      %v2026 = vunpack.c.l.b16 %v1976
      %v2027 = vunpack.c.l.b16 %v1977
      %v2028 = vunpack.c.l.b16 %v1978
      %v2029 = vunpack.c.l.b16 %v1979
      %v2030 = vunpack.c.l.b16 %v1980
      %v2031 = vunpack.c.l.b16 %v1981
      %v2032 = vunpack.c.l.b16 %v1982
      %v2033 = vunpack.c.l.b16 %v1983
      %v2034 = vunpack.c.l.b16 %v1984
      %v2035 = vunpack.c.l.b16 %v1985
      %v2036 = vunpack.c.l.b16 %v1986
      %v2037 = vunpack.c.l.b16 %v1987
      %v2038 = vunpack.c.l.b16 %v1988
      %v2039 = vunpack.c.l.b16 %v1989
      %v2040 = vunpack.c.l.b16 %v1990
      %v2041 = vunpack.c.l.b16 %v1991
      %v2042 = vpack.c.b16 %v2027, %v2026
      %v2043 = vpack.c.b16 %v2029, %v2028
      %v2044 = vpack.c.b16 %v2031, %v2030
      %v2045 = vpack.c.b16 %v2033, %v2032
      %v2046 = vpack.c.b16 %v2035, %v2034
      %v2047 = vpack.c.b16 %v2037, %v2036
      %v2048 = vpack.c.b16 %v2039, %v2038
      %v2049 = vpack.c.b16 %v2041, %v2040
      %2058 = vmatprep.subr.bf16.mxu0 0
      %2059 = vmatpush1.bf16.msra.mxu0 %v2042
      %2060 = vmatprep.subr.bf16.mxu0 0
      %2061 = vmatpush1.bf16.msra.mxu0 %v2043
      %2062 = vmatprep.subr.bf16.mxu0 0
      %2063 = vmatpush1.bf16.msra.mxu0 %v2044
      %2064 = vmatprep.subr.bf16.mxu0 0
      %2065 = vmatpush1.bf16.msra.mxu0 %v2045
      %2066 = vmatprep.subr.bf16.mxu0 0
      %2067 = vmatpush1.bf16.msra.mxu0 %v2046
      %2068 = vmatprep.subr.bf16.mxu0 0
      %2069 = vmatpush1.bf16.msra.mxu0 %v2047
      %2070 = vmatprep.subr.bf16.mxu0 0
      %2071 = vmatpush1.bf16.msra.mxu0 %v2048
      %2072 = vmatprep.subr.bf16.mxu0 0
      %2073 = vmatpush1.bf16.msra.mxu0 %v2049
      %2074 = vmatprep.subr.bf16.mxu0 0
      %2075 = vmatpush1.bf16.msra.mxu0 0
      %2076 = vmatprep.subr.bf16.mxu0 0
      %2077 = vmatpush1.bf16.msra.mxu0 0
      %2078 = vmatprep.subr.bf16.mxu0 0
      %2079 = vmatpush1.bf16.msra.mxu0 0
      %2080 = vmatprep.subr.bf16.mxu0 0
      %2081 = vmatpush1.bf16.msra.mxu0 0
      %2082 = vmatprep.subr.bf16.mxu0 0
      %2083 = vmatpush1.bf16.msra.mxu0 0
      %2084 = vmatprep.subr.bf16.mxu0 0
      %2085 = vmatpush1.bf16.msra.mxu0 0
      %2086 = vmatprep.subr.bf16.mxu0 0
      %2087 = vmatpush1.bf16.msra.mxu0 0
      %2088 = vmatprep.subr.bf16.mxu0 0
      %2089 = vmatpush1.bf16.msra.mxu0 0
      %2090 = vmatprep.mubr.bf16.mxu0 0
      %2091 = vmatmul.mubr.bf16.gmra.mrb[0].mxu0 %v2008
      %v2092 = vpop.f32.mrb[0].mxu0
      %v2093 = vadd.f32 0.0, %v2092
      %v2094 = vpop.f32.mrb[0].mxu0
      %v2095 = vpop.f32.mrb[0].mxu0
      %v2096 = vadd.f32 0.0, %v2095
      %v2097 = vpop.f32.mrb[0].mxu0
      %2098 = vdwg.mxu0
      %v2099 = vadd.f32 %v1877, %v2093
      %v2100 = vadd.f32 %v1878, %v2096
      %v2101 = vld [vmem:[%s928] sm:$0x3]
      %v2102 = vld [vmem:[%s928 + $0x4] sm:$0x3]
      %v2103 = vld [vmem:[%s928 + $0x8] sm:$0x3]
      %v2104 = vld [vmem:[%s928 + $0xc] sm:$0x3]
      %s2105 = scalar_lea.vmem %s3, 384
      %v2106 = vld [vmem:[%s2105] sm:$0xf]
      %v2107 = vld [vmem:[%s2105 + $0x4] sm:$0xf]
      %v2108 = vld [vmem:[%s2105 + $0x8] sm:$0xf]
      %v2109 = vld [vmem:[%s2105 + $0xc] sm:$0xf]
      %v2110 = vld [vmem:[%s2105 + $0x10] sm:$0xf]
      %v2111 = vld [vmem:[%s2105 + $0x14] sm:$0xf]
      %v2112 = vld [vmem:[%s2105 + $0x18] sm:$0xf]
      %v2113 = vld [vmem:[%s2105 + $0x1c] sm:$0xf]
      %v2114 = vld [vmem:[%s2105 + $0x20] sm:$0xf]
      %v2115 = vld [vmem:[%s2105 + $0x24] sm:$0xf]
      %v2116 = vld [vmem:[%s2105 + $0x28] sm:$0xf]
      %v2117 = vld [vmem:[%s2105 + $0x2c] sm:$0xf]
      %v2118 = vld [vmem:[%s2105 + $0x30] sm:$0xf]
      %v2119 = vld [vmem:[%s2105 + $0x34] sm:$0xf]
      %v2120 = vld [vmem:[%s2105 + $0x38] sm:$0xf]
      %v2121 = vld [vmem:[%s2105 + $0x3c] sm:$0xf]
      %v2126 = vcombine.low %v2101, %v2102
      %v2127 = vcombine.low %v2103, %v2104
      %v2129 = vunpack.c.l.s4 1983009808
      %v2130 = vunpack.c.0.s8 %v2129
      %v2131 = vlaneseq
      %v2132 = vshrl.u32 %v2131, 7
      %v2133 = vsub.s32 %v2130, %v2132
      %v2134 = vrot.slane %v2126, %v2133
      %v2136 = vunpack.c.l.s4 1983009808
      %v2137 = vunpack.c.0.s8 %v2136
      %v2138 = vlaneseq
      %v2139 = vshrl.u32 %v2138, 7
      %v2140 = vsub.s32 %v2137, %v2139
      %v2141 = vrot.slane %v2127, %v2140
      %v2142 = vcombine.low %v2134, %v2141
      %v2160 = vunpack.c.l.b16 %v2106
      %v2161 = vunpack.c.l.b16 %v2107
      %v2162 = vunpack.c.l.b16 %v2108
      %v2163 = vunpack.c.l.b16 %v2109
      %v2164 = vunpack.c.l.b16 %v2110
      %v2165 = vunpack.c.l.b16 %v2111
      %v2166 = vunpack.c.l.b16 %v2112
      %v2167 = vunpack.c.l.b16 %v2113
      %v2168 = vunpack.c.l.b16 %v2114
      %v2169 = vunpack.c.l.b16 %v2115
      %v2170 = vunpack.c.l.b16 %v2116
      %v2171 = vunpack.c.l.b16 %v2117
      %v2172 = vunpack.c.l.b16 %v2118
      %v2173 = vunpack.c.l.b16 %v2119
      %v2174 = vunpack.c.l.b16 %v2120
      %v2175 = vunpack.c.l.b16 %v2121
      %v2176 = vpack.c.b16 %v2161, %v2160
      %v2177 = vpack.c.b16 %v2163, %v2162
      %v2178 = vpack.c.b16 %v2165, %v2164
      %v2179 = vpack.c.b16 %v2167, %v2166
      %v2180 = vpack.c.b16 %v2169, %v2168
      %v2181 = vpack.c.b16 %v2171, %v2170
      %v2182 = vpack.c.b16 %v2173, %v2172
      %v2183 = vpack.c.b16 %v2175, %v2174
      %2192 = vmatprep.subr.bf16.mxu0 0
      %2193 = vmatpush1.bf16.msra.mxu0 %v2176
      %2194 = vmatprep.subr.bf16.mxu0 0
      %2195 = vmatpush1.bf16.msra.mxu0 %v2177
      %2196 = vmatprep.subr.bf16.mxu0 0
      %2197 = vmatpush1.bf16.msra.mxu0 %v2178
      %2198 = vmatprep.subr.bf16.mxu0 0
      %2199 = vmatpush1.bf16.msra.mxu0 %v2179
      %2200 = vmatprep.subr.bf16.mxu0 0
      %2201 = vmatpush1.bf16.msra.mxu0 %v2180
      %2202 = vmatprep.subr.bf16.mxu0 0
      %2203 = vmatpush1.bf16.msra.mxu0 %v2181
      %2204 = vmatprep.subr.bf16.mxu0 0
      %2205 = vmatpush1.bf16.msra.mxu0 %v2182
      %2206 = vmatprep.subr.bf16.mxu0 0
      %2207 = vmatpush1.bf16.msra.mxu0 %v2183
      %2208 = vmatprep.subr.bf16.mxu0 0
      %2209 = vmatpush1.bf16.msra.mxu0 0
      %2210 = vmatprep.subr.bf16.mxu0 0
      %2211 = vmatpush1.bf16.msra.mxu0 0
      %2212 = vmatprep.subr.bf16.mxu0 0
      %2213 = vmatpush1.bf16.msra.mxu0 0
      %2214 = vmatprep.subr.bf16.mxu0 0
      %2215 = vmatpush1.bf16.msra.mxu0 0
      %2216 = vmatprep.subr.bf16.mxu0 0
      %2217 = vmatpush1.bf16.msra.mxu0 0
      %2218 = vmatprep.subr.bf16.mxu0 0
      %2219 = vmatpush1.bf16.msra.mxu0 0
      %2220 = vmatprep.subr.bf16.mxu0 0
      %2221 = vmatpush1.bf16.msra.mxu0 0
      %2222 = vmatprep.subr.bf16.mxu0 0
      %2223 = vmatpush1.bf16.msra.mxu0 0
      %2224 = vmatprep.mubr.bf16.mxu0 0
      %2225 = vmatmul.mubr.bf16.gmra.mrb[0].mxu0 %v2142
      %v2226 = vpop.f32.mrb[0].mxu0
      %v2227 = vadd.f32 0.0, %v2226
      %v2228 = vpop.f32.mrb[0].mxu0
      %v2229 = vpop.f32.mrb[0].mxu0
      %v2230 = vadd.f32 0.0, %v2229
      %v2231 = vpop.f32.mrb[0].mxu0
      %2232 = vdwg.mxu0
      %v2233 = vadd.f32 %v2099, %v2227
      %v2234 = vadd.f32 %v2100, %v2230
      %v2235 = vld [vmem:[%s837] sm:$0x7]
      %v2236 = vld [vmem:[%s837 + $0x4] sm:$0x7]
      %v2237 = vld [vmem:[%s837 + $0x8] sm:$0x7]
      %v2238 = vld [vmem:[%s837 + $0xc] sm:$0x7]
      %v2244 = vunpack.c.l.s4 1983009808
      %v2245 = vunpack.c.0.s8 %v2244
      %v2246 = vlaneseq
      %v2247 = vshrl.u32 %v2246, 7
      %v2248 = vsub.s32 %v2245, %v2247
      %v2249 = vrot.slane %v2235, %v2248
      %v2250 = vcombine.high %v2249, %v2249
      %v2252 = vunpack.c.l.s4 1983009808
      %v2253 = vunpack.c.0.s8 %v2252
      %v2254 = vlaneseq
      %v2255 = vshrl.u32 %v2254, 7
      %v2256 = vsub.s32 %v2253, %v2255
      %v2257 = vrot.slane %v2236, %v2256
      %v2258 = vcombine.high %v2257, %v2257
      %v2260 = vunpack.c.l.s4 1983009808
      %v2261 = vunpack.c.0.s8 %v2260
      %v2262 = vlaneseq
      %v2263 = vshrl.u32 %v2262, 7
      %v2264 = vsub.s32 %v2261, %v2263
      %v2265 = vrot.slane %v2237, %v2264
      %v2266 = vcombine.high %v2265, %v2265
      %v2268 = vunpack.c.l.s4 1983009808
      %v2269 = vunpack.c.0.s8 %v2268
      %v2270 = vlaneseq
      %v2271 = vshrl.u32 %v2270, 7
      %v2272 = vsub.s32 %v2269, %v2271
      %v2273 = vrot.slane %v2238, %v2272
      %v2274 = vcombine.high %v2273, %v2273
      %v2276 = vshrl.u32 %v2249, 16
      %v2278 = vrot.slane %v2276, 6
      %v2279 = vshll.u32 %v2249, 16
      %v2281 = vrot.slane %v2279, 7
      %v2282 = vor.u32 %v2278, %v2281
      %v2283 = vrot.slane %v2282, 2
      %v2285 = vshll.u32 %v2250, 16
      %v2287 = vrot.slane %v2285, 7
      %v2288 = vsel %vm1009, %v2283, %v2287
      %v2290 = vshrl.u32 %v2257, 16
      %v2292 = vrot.slane %v2290, 6
      %v2293 = vshll.u32 %v2257, 16
      %v2295 = vrot.slane %v2293, 7
      %v2296 = vor.u32 %v2292, %v2295
      %v2297 = vrot.slane %v2296, 2
      %v2299 = vshll.u32 %v2258, 16
      %v2301 = vrot.slane %v2299, 7
      %v2302 = vsel %vm1009, %v2297, %v2301
      %v2304 = vshrl.u32 %v2265, 16
      %v2306 = vrot.slane %v2304, 6
      %v2307 = vshll.u32 %v2265, 16
      %v2309 = vrot.slane %v2307, 7
      %v2310 = vor.u32 %v2306, %v2309
      %v2311 = vrot.slane %v2310, 2
      %v2313 = vshll.u32 %v2266, 16
      %v2315 = vrot.slane %v2313, 7
      %v2316 = vsel %vm1009, %v2311, %v2315
      %v2318 = vshrl.u32 %v2273, 16
      %v2320 = vrot.slane %v2318, 6
      %v2321 = vshll.u32 %v2273, 16
      %v2323 = vrot.slane %v2321, 7
      %v2324 = vor.u32 %v2320, %v2323
      %v2325 = vrot.slane %v2324, 2
      %v2327 = vshll.u32 %v2274, 16
      %v2329 = vrot.slane %v2327, 7
      %v2330 = vsel %vm1009, %v2325, %v2329
      %s2331 = scalar_lea.vmem %s3, 448
      %v2332 = vld [vmem:[%s2331] sm:$0xf]
      %v2333 = vld [vmem:[%s2331 + $0x4] sm:$0xf]
      %v2334 = vld [vmem:[%s2331 + $0x8] sm:$0xf]
      %v2335 = vld [vmem:[%s2331 + $0xc] sm:$0xf]
      %v2336 = vld [vmem:[%s2331 + $0x10] sm:$0xf]
      %v2337 = vld [vmem:[%s2331 + $0x14] sm:$0xf]
      %v2338 = vld [vmem:[%s2331 + $0x18] sm:$0xf]
      %v2339 = vld [vmem:[%s2331 + $0x1c] sm:$0xf]
      %v2340 = vld [vmem:[%s2331 + $0x20] sm:$0xf]
      %v2341 = vld [vmem:[%s2331 + $0x24] sm:$0xf]
      %v2342 = vld [vmem:[%s2331 + $0x28] sm:$0xf]
      %v2343 = vld [vmem:[%s2331 + $0x2c] sm:$0xf]
      %v2344 = vld [vmem:[%s2331 + $0x30] sm:$0xf]
      %v2345 = vld [vmem:[%s2331 + $0x34] sm:$0xf]
      %v2346 = vld [vmem:[%s2331 + $0x38] sm:$0xf]
      %v2347 = vld [vmem:[%s2331 + $0x3c] sm:$0xf]
      %v2348 = vcombine.low %v2288, %v2302
      %v2349 = vcombine.low %v2316, %v2330
      %v2351 = vunpack.c.l.s4 1983009808
      %v2352 = vunpack.c.0.s8 %v2351
      %v2353 = vlaneseq
      %v2354 = vshrl.u32 %v2353, 7
      %v2355 = vsub.s32 %v2352, %v2354
      %v2356 = vrot.slane %v2348, %v2355
      %v2358 = vunpack.c.l.s4 1983009808
      %v2359 = vunpack.c.0.s8 %v2358
      %v2360 = vlaneseq
      %v2361 = vshrl.u32 %v2360, 7
      %v2362 = vsub.s32 %v2359, %v2361
      %v2363 = vrot.slane %v2349, %v2362
      %v2364 = vcombine.low %v2356, %v2363
      %v2382 = vunpack.c.l.b16 %v2332
      %v2383 = vunpack.c.l.b16 %v2333
      %v2384 = vunpack.c.l.b16 %v2334
      %v2385 = vunpack.c.l.b16 %v2335
      %v2386 = vunpack.c.l.b16 %v2336
      %v2387 = vunpack.c.l.b16 %v2337
      %v2388 = vunpack.c.l.b16 %v2338
      %v2389 = vunpack.c.l.b16 %v2339
      %v2390 = vunpack.c.l.b16 %v2340
      %v2391 = vunpack.c.l.b16 %v2341
      %v2392 = vunpack.c.l.b16 %v2342
      %v2393 = vunpack.c.l.b16 %v2343
      %v2394 = vunpack.c.l.b16 %v2344
      %v2395 = vunpack.c.l.b16 %v2345
      %v2396 = vunpack.c.l.b16 %v2346
      %v2397 = vunpack.c.l.b16 %v2347
      %v2398 = vpack.c.b16 %v2383, %v2382
      %v2399 = vpack.c.b16 %v2385, %v2384
      %v2400 = vpack.c.b16 %v2387, %v2386
      %v2401 = vpack.c.b16 %v2389, %v2388
      %v2402 = vpack.c.b16 %v2391, %v2390
      %v2403 = vpack.c.b16 %v2393, %v2392
      %v2404 = vpack.c.b16 %v2395, %v2394
      %v2405 = vpack.c.b16 %v2397, %v2396
      %2414 = vmatprep.subr.bf16.mxu0 0
      %2415 = vmatpush1.bf16.msra.mxu0 %v2398
      %2416 = vmatprep.subr.bf16.mxu0 0
      %2417 = vmatpush1.bf16.msra.mxu0 %v2399
      %2418 = vmatprep.subr.bf16.mxu0 0
      %2419 = vmatpush1.bf16.msra.mxu0 %v2400
      %2420 = vmatprep.subr.bf16.mxu0 0
      %2421 = vmatpush1.bf16.msra.mxu0 %v2401
      %2422 = vmatprep.subr.bf16.mxu0 0
      %2423 = vmatpush1.bf16.msra.mxu0 %v2402
      %2424 = vmatprep.subr.bf16.mxu0 0
      %2425 = vmatpush1.bf16.msra.mxu0 %v2403
      %2426 = vmatprep.subr.bf16.mxu0 0
      %2427 = vmatpush1.bf16.msra.mxu0 %v2404
      %2428 = vmatprep.subr.bf16.mxu0 0
      %2429 = vmatpush1.bf16.msra.mxu0 %v2405
      %2430 = vmatprep.subr.bf16.mxu0 0
      %2431 = vmatpush1.bf16.msra.mxu0 0
      %2432 = vmatprep.subr.bf16.mxu0 0
      %2433 = vmatpush1.bf16.msra.mxu0 0
      %2434 = vmatprep.subr.bf16.mxu0 0
      %2435 = vmatpush1.bf16.msra.mxu0 0
      %2436 = vmatprep.subr.bf16.mxu0 0
      %2437 = vmatpush1.bf16.msra.mxu0 0
      %2438 = vmatprep.subr.bf16.mxu0 0
      %2439 = vmatpush1.bf16.msra.mxu0 0
      %2440 = vmatprep.subr.bf16.mxu0 0
      %2441 = vmatpush1.bf16.msra.mxu0 0
      %2442 = vmatprep.subr.bf16.mxu0 0
      %2443 = vmatpush1.bf16.msra.mxu0 0
      %2444 = vmatprep.subr.bf16.mxu0 0
      %2445 = vmatpush1.bf16.msra.mxu0 0
      %2446 = vmatprep.mubr.bf16.mxu0 0
      %2447 = vmatmul.mubr.bf16.gmra.mrb[0].mxu0 %v2364
      %v2448 = vpop.f32.mrb[0].mxu0
      %v2449 = vadd.f32 0.0, %v2448
      %v2450 = vpop.f32.mrb[0].mxu0
      %v2451 = vpop.f32.mrb[0].mxu0
      %v2452 = vadd.f32 0.0, %v2451
      %v2453 = vpop.f32.mrb[0].mxu0
      %2454 = vdwg.mxu0
      %v2455 = vadd.f32 %v2233, %v2449
      %v2456 = vadd.f32 %v2234, %v2452
      %v2457 = vld [vmem:[%s928] sm:$0x7]
      %v2458 = vld [vmem:[%s928 + $0x4] sm:$0x7]
      %v2459 = vld [vmem:[%s928 + $0x8] sm:$0x7]
      %v2460 = vld [vmem:[%s928 + $0xc] sm:$0x7]
      %v2466 = vunpack.c.l.s4 1983009808
      %v2467 = vunpack.c.0.s8 %v2466
      %v2468 = vlaneseq
      %v2469 = vshrl.u32 %v2468, 7
      %v2470 = vsub.s32 %v2467, %v2469
      %v2471 = vrot.slane %v2457, %v2470
      %v2472 = vcombine.high %v2471, %v2471
      %v2474 = vunpack.c.l.s4 1983009808
      %v2475 = vunpack.c.0.s8 %v2474
      %v2476 = vlaneseq
      %v2477 = vshrl.u32 %v2476, 7
      %v2478 = vsub.s32 %v2475, %v2477
      %v2479 = vrot.slane %v2458, %v2478
      %v2480 = vcombine.high %v2479, %v2479
      %v2482 = vunpack.c.l.s4 1983009808
      %v2483 = vunpack.c.0.s8 %v2482
      %v2484 = vlaneseq
      %v2485 = vshrl.u32 %v2484, 7
      %v2486 = vsub.s32 %v2483, %v2485
      %v2487 = vrot.slane %v2459, %v2486
      %v2488 = vcombine.high %v2487, %v2487
      %v2490 = vunpack.c.l.s4 1983009808
      %v2491 = vunpack.c.0.s8 %v2490
      %v2492 = vlaneseq
      %v2493 = vshrl.u32 %v2492, 7
      %v2494 = vsub.s32 %v2491, %v2493
      %v2495 = vrot.slane %v2460, %v2494
      %v2496 = vcombine.high %v2495, %v2495
      %v2498 = vshrl.u32 %v2471, 16
      %v2500 = vrot.slane %v2498, 6
      %v2501 = vshll.u32 %v2471, 16
      %v2503 = vrot.slane %v2501, 7
      %v2504 = vor.u32 %v2500, %v2503
      %v2505 = vrot.slane %v2504, 2
      %v2507 = vshll.u32 %v2472, 16
      %v2509 = vrot.slane %v2507, 7
      %v2510 = vsel %vm1009, %v2505, %v2509
      %v2512 = vshrl.u32 %v2479, 16
      %v2514 = vrot.slane %v2512, 6
      %v2515 = vshll.u32 %v2479, 16
      %v2517 = vrot.slane %v2515, 7
      %v2518 = vor.u32 %v2514, %v2517
      %v2519 = vrot.slane %v2518, 2
      %v2521 = vshll.u32 %v2480, 16
      %v2523 = vrot.slane %v2521, 7
      %v2524 = vsel %vm1009, %v2519, %v2523
      %v2526 = vshrl.u32 %v2487, 16
      %v2528 = vrot.slane %v2526, 6
      %v2529 = vshll.u32 %v2487, 16
      %v2531 = vrot.slane %v2529, 7
      %v2532 = vor.u32 %v2528, %v2531
      %v2533 = vrot.slane %v2532, 2
      %v2535 = vshll.u32 %v2488, 16
      %v2537 = vrot.slane %v2535, 7
      %v2538 = vsel %vm1009, %v2533, %v2537
      %v2540 = vshrl.u32 %v2495, 16
      %v2542 = vrot.slane %v2540, 6
      %v2543 = vshll.u32 %v2495, 16
      %v2545 = vrot.slane %v2543, 7
      %v2546 = vor.u32 %v2542, %v2545
      %v2547 = vrot.slane %v2546, 2
      %v2549 = vshll.u32 %v2496, 16
      %v2551 = vrot.slane %v2549, 7
      %v2552 = vsel %vm1009, %v2547, %v2551
      %s2553 = scalar_lea.vmem %s3, 512
      %v2554 = vld [vmem:[%s2553] sm:$0xf]
      %v2555 = vld [vmem:[%s2553 + $0x4] sm:$0xf]
      %v2556 = vld [vmem:[%s2553 + $0x8] sm:$0xf]
      %v2557 = vld [vmem:[%s2553 + $0xc] sm:$0xf]
      %v2558 = vld [vmem:[%s2553 + $0x10] sm:$0xf]
      %v2559 = vld [vmem:[%s2553 + $0x14] sm:$0xf]
      %v2560 = vld [vmem:[%s2553 + $0x18] sm:$0xf]
      %v2561 = vld [vmem:[%s2553 + $0x1c] sm:$0xf]
      %v2562 = vld [vmem:[%s2553 + $0x20] sm:$0xf]
      %v2563 = vld [vmem:[%s2553 + $0x24] sm:$0xf]
      %v2564 = vld [vmem:[%s2553 + $0x28] sm:$0xf]
      %v2565 = vld [vmem:[%s2553 + $0x2c] sm:$0xf]
      %v2566 = vld [vmem:[%s2553 + $0x30] sm:$0xf]
      %v2567 = vld [vmem:[%s2553 + $0x34] sm:$0xf]
      %v2568 = vld [vmem:[%s2553 + $0x38] sm:$0xf]
      %v2569 = vld [vmem:[%s2553 + $0x3c] sm:$0xf]
      %v2570 = vcombine.low %v2510, %v2524
      %v2571 = vcombine.low %v2538, %v2552
      %v2573 = vunpack.c.l.s4 1983009808
      %v2574 = vunpack.c.0.s8 %v2573
      %v2575 = vlaneseq
      %v2576 = vshrl.u32 %v2575, 7
      %v2577 = vsub.s32 %v2574, %v2576
      %v2578 = vrot.slane %v2570, %v2577
      %v2580 = vunpack.c.l.s4 1983009808
      %v2581 = vunpack.c.0.s8 %v2580
      %v2582 = vlaneseq
      %v2583 = vshrl.u32 %v2582, 7
      %v2584 = vsub.s32 %v2581, %v2583
      %v2585 = vrot.slane %v2571, %v2584
      %v2586 = vcombine.low %v2578, %v2585
      %v2604 = vunpack.c.l.b16 %v2554
      %v2605 = vunpack.c.l.b16 %v2555
      %v2606 = vunpack.c.l.b16 %v2556
      %v2607 = vunpack.c.l.b16 %v2557
      %v2608 = vunpack.c.l.b16 %v2558
      %v2609 = vunpack.c.l.b16 %v2559
      %v2610 = vunpack.c.l.b16 %v2560
      %v2611 = vunpack.c.l.b16 %v2561
      %v2612 = vunpack.c.l.b16 %v2562
      %v2613 = vunpack.c.l.b16 %v2563
      %v2614 = vunpack.c.l.b16 %v2564
      %v2615 = vunpack.c.l.b16 %v2565
      %v2616 = vunpack.c.l.b16 %v2566
      %v2617 = vunpack.c.l.b16 %v2567
      %v2618 = vunpack.c.l.b16 %v2568
      %v2619 = vunpack.c.l.b16 %v2569
      %v2620 = vpack.c.b16 %v2605, %v2604
      %v2621 = vpack.c.b16 %v2607, %v2606
      %v2622 = vpack.c.b16 %v2609, %v2608
      %v2623 = vpack.c.b16 %v2611, %v2610
      %v2624 = vpack.c.b16 %v2613, %v2612
      %v2625 = vpack.c.b16 %v2615, %v2614
      %v2626 = vpack.c.b16 %v2617, %v2616
      %v2627 = vpack.c.b16 %v2619, %v2618
      %2636 = vmatprep.subr.bf16.mxu0 0
      %2637 = vmatpush1.bf16.msra.mxu0 %v2620
      %2638 = vmatprep.subr.bf16.mxu0 0
      %2639 = vmatpush1.bf16.msra.mxu0 %v2621
      %2640 = vmatprep.subr.bf16.mxu0 0
      %2641 = vmatpush1.bf16.msra.mxu0 %v2622
      %2642 = vmatprep.subr.bf16.mxu0 0
      %2643 = vmatpush1.bf16.msra.mxu0 %v2623
      %2644 = vmatprep.subr.bf16.mxu0 0
      %2645 = vmatpush1.bf16.msra.mxu0 %v2624
      %2646 = vmatprep.subr.bf16.mxu0 0
      %2647 = vmatpush1.bf16.msra.mxu0 %v2625
      %2648 = vmatprep.subr.bf16.mxu0 0
      %2649 = vmatpush1.bf16.msra.mxu0 %v2626
      %2650 = vmatprep.subr.bf16.mxu0 0
      %2651 = vmatpush1.bf16.msra.mxu0 %v2627
      %2652 = vmatprep.subr.bf16.mxu0 0
      %2653 = vmatpush1.bf16.msra.mxu0 0
      %2654 = vmatprep.subr.bf16.mxu0 0
      %2655 = vmatpush1.bf16.msra.mxu0 0
      %2656 = vmatprep.subr.bf16.mxu0 0
      %2657 = vmatpush1.bf16.msra.mxu0 0
      %2658 = vmatprep.subr.bf16.mxu0 0
      %2659 = vmatpush1.bf16.msra.mxu0 0
      %2660 = vmatprep.subr.bf16.mxu0 0
      %2661 = vmatpush1.bf16.msra.mxu0 0
      %2662 = vmatprep.subr.bf16.mxu0 0
      %2663 = vmatpush1.bf16.msra.mxu0 0
      %2664 = vmatprep.subr.bf16.mxu0 0
      %2665 = vmatpush1.bf16.msra.mxu0 0
      %2666 = vmatprep.subr.bf16.mxu0 0
      %2667 = vmatpush1.bf16.msra.mxu0 0
      %2668 = vmatprep.mubr.bf16.mxu0 0
      %2669 = vmatmul.mubr.bf16.gmra.mrb[0].mxu0 %v2586
      %v2670 = vpop.f32.mrb[0].mxu0
      %v2671 = vadd.f32 0.0, %v2670
      %v2672 = vpop.f32.mrb[0].mxu0
      %v2673 = vpop.f32.mrb[0].mxu0
      %v2674 = vadd.f32 0.0, %v2673
      %v2675 = vpop.f32.mrb[0].mxu0
      %2676 = vdwg.mxu0
      %v2677 = vadd.f32 %v2455, %v2671
      %v2678 = vadd.f32 %v2456, %v2674
      %v2679 = vld [vmem:[%s4] sm:$0x1]
      %v2681 = vlaneseq
      %v2682 = vshrl.u32 %v2681, 7
      %v2683 = vsub.s32 0, %v2682
      %v2684 = vrot.slane %v2679, %v2683
      %v2686 = vadd.f32 %v2677, %v2684
      %v2687 = vadd.f32 %v2678, %v2684
      %v2688 = vmax.f32 %v2686, 0.0
      %v2689 = vmax.f32 %v2687, 0.0
      %v2690 = vadd.f32 %v2688, %v2689
      %v2691 = vrot.slane %v2690, 4
      %v2692 = vadd.f32 %v2690, %v2691
      %v2693 = vrot.slane %v2692, 2
      %v2694 = vadd.f32 %v2692, %v2693
      %v2695 = vrot.slane %v2694, 1
      %v2696 = vadd.f32 %v2694, %v2695
      %v2697 = vmul.f32 %v2696, 0.0625
      %v2698 = vpack.c.bf16 %v2697, %v2697
      %v2699 = vld [vmem:[%s5] sm:$0xf]
      %v2700 = vld [vmem:[%s5 + $0x4] sm:$0xf]
      %v2701 = vld [vmem:[%s5 + $0x8] sm:$0xf]
      %v2702 = vld [vmem:[%s5 + $0xc] sm:$0xf]
      %v2703 = vld [vmem:[%s5 + $0x10] sm:$0xf]
      %v2704 = vld [vmem:[%s5 + $0x14] sm:$0xf]
      %v2705 = vld [vmem:[%s5 + $0x18] sm:$0xf]
      %v2706 = vld [vmem:[%s5 + $0x1c] sm:$0xf]
      %v2707 = vld [vmem:[%s5 + $0x20] sm:$0xf]
      %v2708 = vld [vmem:[%s5 + $0x24] sm:$0xf]
      %v2709 = vld [vmem:[%s5 + $0x28] sm:$0xf]
      %v2710 = vld [vmem:[%s5 + $0x2c] sm:$0xf]
      %v2711 = vld [vmem:[%s5 + $0x30] sm:$0xf]
      %v2712 = vld [vmem:[%s5 + $0x34] sm:$0xf]
      %v2713 = vld [vmem:[%s5 + $0x38] sm:$0xf]
      %v2714 = vld [vmem:[%s5 + $0x3c] sm:$0xf]
      %v2715 = vld [vmem:[%s6] sm:$0x1]
      %v2732 = vunpack.c.l.b16 %v2699
      %v2733 = vunpack.c.l.b16 %v2700
      %v2734 = vunpack.c.l.b16 %v2701
      %v2735 = vunpack.c.l.b16 %v2702
      %v2736 = vunpack.c.l.b16 %v2703
      %v2737 = vunpack.c.l.b16 %v2704
      %v2738 = vunpack.c.l.b16 %v2705
      %v2739 = vunpack.c.l.b16 %v2706
      %v2740 = vunpack.c.l.b16 %v2707
      %v2741 = vunpack.c.l.b16 %v2708
      %v2742 = vunpack.c.l.b16 %v2709
      %v2743 = vunpack.c.l.b16 %v2710
      %v2744 = vunpack.c.l.b16 %v2711
      %v2745 = vunpack.c.l.b16 %v2712
      %v2746 = vunpack.c.l.b16 %v2713
      %v2747 = vunpack.c.l.b16 %v2714
      %v2748 = vpack.c.b16 %v2733, %v2732
      %v2749 = vpack.c.b16 %v2735, %v2734
      %v2750 = vpack.c.b16 %v2737, %v2736
      %v2751 = vpack.c.b16 %v2739, %v2738
      %v2752 = vpack.c.b16 %v2741, %v2740
      %v2753 = vpack.c.b16 %v2743, %v2742
      %v2754 = vpack.c.b16 %v2745, %v2744
      %v2755 = vpack.c.b16 %v2747, %v2746
      %2764 = vmatprep.subr.bf16.mxu0 0
      %2765 = vmatpush1.bf16.msra.mxu0 %v2748
      %2766 = vmatprep.subr.bf16.mxu0 0
      %2767 = vmatpush1.bf16.msra.mxu0 %v2749
      %2768 = vmatprep.subr.bf16.mxu0 0
      %2769 = vmatpush1.bf16.msra.mxu0 %v2750
      %2770 = vmatprep.subr.bf16.mxu0 0
      %2771 = vmatpush1.bf16.msra.mxu0 %v2751
      %2772 = vmatprep.subr.bf16.mxu0 0
      %2773 = vmatpush1.bf16.msra.mxu0 %v2752
      %2774 = vmatprep.subr.bf16.mxu0 0
      %2775 = vmatpush1.bf16.msra.mxu0 %v2753
      %2776 = vmatprep.subr.bf16.mxu0 0
      %2777 = vmatpush1.bf16.msra.mxu0 %v2754
      %2778 = vmatprep.subr.bf16.mxu0 0
      %2779 = vmatpush1.bf16.msra.mxu0 %v2755
      %2780 = vmatprep.subr.bf16.mxu0 0
      %2781 = vmatpush1.bf16.msra.mxu0 0
      %2782 = vmatprep.subr.bf16.mxu0 0
      %2783 = vmatpush1.bf16.msra.mxu0 0
      %2784 = vmatprep.subr.bf16.mxu0 0
      %2785 = vmatpush1.bf16.msra.mxu0 0
      %2786 = vmatprep.subr.bf16.mxu0 0
      %2787 = vmatpush1.bf16.msra.mxu0 0
      %2788 = vmatprep.subr.bf16.mxu0 0
      %2789 = vmatpush1.bf16.msra.mxu0 0
      %2790 = vmatprep.subr.bf16.mxu0 0
      %2791 = vmatpush1.bf16.msra.mxu0 0
      %2792 = vmatprep.subr.bf16.mxu0 0
      %2793 = vmatpush1.bf16.msra.mxu0 0
      %2794 = vmatprep.subr.bf16.mxu0 0
      %2795 = vmatpush1.bf16.msra.mxu0 0
      %2796 = vmatprep.mubr.bf16.mxu0 0
      %2797 = vmatmul.mubr.bf16.gmra.mrb[0].mxu0 %v2698
      %v2798 = vpop.f32.mrb[0].mxu0
      %v2799 = vadd.f32 %v2715, %v2798
      %v2800 = vpop.f32.mrb[0].mxu0
      %v2801 = vpop.f32.mrb[0].mxu0
      %v2802 = vpop.f32.mrb[0].mxu0
      %2803 = vdwg.mxu0
      %v2804 = vmax.f32 %v2799, 0.0
      %v2805 = vld [vmem:[%s7] sm:$0x1]
      %v2806 = vmul.f32 %v2804, %v2805
      %vm2807 = vcmask 1040384
      %v2808 = vsel %vm2807, %v2806, 0.0
      %2809 = vadd.xlane.f32.xlu0 %v2808
      %v2810 = vpop.xlane.xlu0 %2809
      %v2811 = vld [vmem:[#allocation3] sm:$0x1]
      %v2812 = vadd.f32 %v2810, %v2811
      %2814 = vset.pattern.permute.xlu0 0
      %2815 = vperm.xlu0 %2814, %v2812
      %v2816 = vpop.permute.xlu0 %2815
      %2818 = vst [vmem:[%s330] sm:$0x1] %v2816
      %p2819 = scmp.lt.s32.totalorder %s22, 1
      %s2820 = scalar_select %p2819, %s22, 1
      %s2821 = scalar_lea.vmem %s9, %s2820
      // Predicated region
      $region57: #{discriminative_forward.1} parent=55 // pred_check
        %p2822 = pneg %p234
      $region58: #{discriminative_forward.1} parent=55 // pred_check_branch
        %2824 = sbr.rel (%p2822) target = $region60
      $region59: #{discriminative_forward.1} parent=55 // pred_region
        _
      $region60: #{discriminative_forward.1} parent=55 // pred_fallthru
        _
    $region56: #{discriminative_forward.1} parent=5 // pred_fallthru
      _
    %p2825 = scmp.le.s32.totalorder 2, %s17
    // Predicated region
    $region61: #{discriminative_forward.1} parent=5 // pred_check
      %p2826 = pneg %p2825
    $region62: #{discriminative_forward.1} parent=5 // pred_check_branch
      %2828 = sbr.rel (%p2826) target = $region64
    $region63: #{discriminative_forward.1} parent=5 // pred_region
      %s2829 = ssub.s32 %s17, 2
      // Predicated region
      $region65: #{discriminative_forward.1} parent=63 // pred_check
        %p2830 = pneg %p240
      $region66: #{discriminative_forward.1} parent=63 // pred_check_branch
        %2832 = sbr.rel (%p2830) target = $region68
      $region67: #{discriminative_forward.1} parent=63 // pred_region
        %p2833 = scmp.lt.s32.totalorder %s23, 1
        %s2834 = scalar_select %p2833, %s23, 1
        %s2835 = scalar_lea.vmem %s9, %s2834
      $region68: #{discriminative_forward.1} parent=63 // pred_fallthru
        _
    $region64: #{discriminative_forward.1} parent=5 // pred_fallthru
      _
  $region6: #{discriminative_forward.1} parent=0 // loop_footer
    %s21 = sadd.s32 1, %s17
  $region7: #{discriminative_forward.1} parent=0 // loop_footer_branch
    %16 = sbr.rel target = $region3
  $region8: #{discriminative_forward.1} parent=0 // loop_exit
    _

</llo_original>
